<compile_context>
chip_gen: v7x
topology: tpu7x:2x2x1
jax: 0.10.0
libtpu: 0.0.40
codegen_flags: <defaults>
</compile_context>

<pallas_src>
import numpy as np

import jax
import jax.numpy as jnp
from jax.experimental import pallas as pl
from jax.experimental.pallas import tpu as pltpu

LANE = 128


# ---------------------------------------------------------------------------
# Small shape helpers
# ---------------------------------------------------------------------------
def _round_up(x, m):
    return ((x + m - 1) // m) * m


def _pick_tile(dim, candidates=(512, 256, 128)):
    """Largest MXU-friendly tile that divides a (128-multiple) padded dim."""
    for c in candidates:
        if dim % c == 0:
            return c
    return dim


def aggregate_tiles(n_pad):
    """Single source of truth for (row-tile, k-tile) of the A_hat aggregation.

    Used both by the host-side block-sparse metadata builder and by the kernel
    wrapper, so the index lists can never get out of sync with the tiling.
    """
    t = _pick_tile(n_pad)
    return t, t


def _pad2(a, rows, cols):
    return jnp.pad(a, ((0, rows - a.shape[0]), (0, cols - a.shape[1])))


# ---------------------------------------------------------------------------
# Kernel 1: tiled matmul (bf16 operands, f32 accumulation, bf16 out) -> XW
# ---------------------------------------------------------------------------
def _matmul_kernel(x_ref, w_ref, o_ref, acc_ref):
    @pl.when(pl.program_id(2) == 0)
    def _():
        acc_ref[...] = jnp.zeros_like(acc_ref)

    acc_ref[...] += jnp.dot(x_ref[...], w_ref[...],
                            preferred_element_type=jnp.float32)

    @pl.when(pl.program_id(2) == pl.num_programs(2) - 1)
    def _():
        o_ref[...] = acc_ref[...].astype(o_ref.dtype)


def matmul_bf16(x, w):
    m, k = x.shape
    _, n = w.shape
    tm, tn = _pick_tile(m), _pick_tile(n)
    # Reduction tile: the feature dim of layer 1 may be tiny (e.g. 16); let the
    # K block cover the full dim in that case (full-array-dim exception).
    tk = _pick_tile(k)
    return pl.pallas_call(
        _matmul_kernel,
        out_shape=jax.ShapeDtypeStruct((m, n), jnp.bfloat16),
        grid_spec=pltpu.PrefetchScalarGridSpec(
            num_scalar_prefetch=0,
            grid=(m // tm, n // tn, k // tk),
            in_specs=[pl.BlockSpec((tm, tk), lambda i, j, kk: (i, kk)),
                      pl.BlockSpec((tk, tn), lambda i, j, kk: (kk, j))],
            out_specs=pl.BlockSpec((tm, tn), lambda i, j, kk: (i, j)),
            scratch_shapes=[pltpu.VMEM((tm, tn), jnp.float32)]),
        compiler_params=pltpu.CompilerParams(
            dimension_semantics=("parallel", "parallel", "arbitrary")),
    )(x, w)


# ---------------------------------------------------------------------------
# Kernel 2: block-sparse  relu( A_hat @ XW + b ).
#
#   counts[i]      : number of nonzero (tm x tk) A_hat blocks in row-tile i
#   kidx[i, k]     : k-block index of the k-th nonzero block in row-tile i
#                    (tail entries repeat the last index -> no extra DMA)
#
# Both are scalar-prefetched into SMEM; the index_maps read kidx so zero blocks
# of A_hat are never DMA'd from HBM, and the dot is gated with k < counts[i].
# ---------------------------------------------------------------------------
def _aggregate_kernel(count_ref, kidx_ref, a_ref, xw_ref, b_ref, o_ref, acc_ref):
    i = pl.program_id(0)
    k = pl.program_id(2)

    @pl.when(k == 0)
    def _():
        # Initialize accumulator with the broadcast bias: saves a full-tile zero
        # store + a VPU add in the epilogue.
        acc_ref[...] = jnp.broadcast_to(b_ref[...], acc_ref.shape)

    @pl.when(k < count_ref[i])
    def _():
        acc_ref[...] += jnp.dot(a_ref[...], xw_ref[...],
                                preferred_element_type=jnp.float32)

    @pl.when(k == pl.num_programs(2) - 1)
    def _():
        o_ref[...] = jnp.maximum(acc_ref[...], 0.0).astype(o_ref.dtype)


def aggregate_relu(counts, kidx, a_hat, xw, b):
    n = a_hat.shape[0]
    h = xw.shape[1]
    tm, tk = aggregate_tiles(n)
    # Stream A_hat exactly once per layer whenever the f32 accumulator fits.
    tn = h if h <= 512 else _pick_tile(h)
    nr, nj = n // tm, h // tn
    max_blocks = kidx.shape[1]
    assert counts.shape == (nr,) and kidx.shape == (nr, max_blocks)

    return pl.pallas_call(
        _aggregate_kernel,
        out_shape=jax.ShapeDtypeStruct((n, h), jnp.bfloat16),
        grid_spec=pltpu.PrefetchScalarGridSpec(
            num_scalar_prefetch=2,
            grid=(nr, nj, max_blocks),
            in_specs=[
                pl.BlockSpec((tm, tk), lambda i, j, k, cnt, kx: (i, kx[i, k])),
                pl.BlockSpec((tk, tn), lambda i, j, k, cnt, kx: (kx[i, k], j)),
                pl.BlockSpec((1, tn), lambda i, j, k, cnt, kx: (0, j)),
            ],
            out_specs=pl.BlockSpec((tm, tn), lambda i, j, k, cnt, kx: (i, j)),
            scratch_shapes=[pltpu.VMEM((tm, tn), jnp.float32)]),
        compiler_params=pltpu.CompilerParams(
            dimension_semantics=("parallel", "parallel", "arbitrary")),
    )(counts, kidx, a_hat, xw, b)


# ---------------------------------------------------------------------------
# Kernel 3: fused mean-pool (P @ h, K-reduction over node tiles) + classifier.
# ---------------------------------------------------------------------------
def _pool_classify_kernel(p_ref, h_ref, w_ref, b_ref, o_ref, acc_ref):
    k = pl.program_id(0)

    @pl.when(k == 0)
    def _():
        acc_ref[...] = jnp.zeros_like(acc_ref)

    acc_ref[...] += jnp.dot(p_ref[...], h_ref[...],
                            preferred_element_type=jnp.float32)

    @pl.when(k == pl.num_programs(0) - 1)
    def _():
        pooled = acc_ref[...].astype(jnp.bfloat16)
        logits = jnp.dot(pooled, w_ref[...],
                         preferred_element_type=jnp.float32) + b_ref[...]
        o_ref[...] = logits.astype(o_ref.dtype)


def pool_classify(pool_mat, h, w, b):
    bsz, n = pool_mat.shape
    hp, c = w.shape
    tk = _pick_tile(n)
    return pl.pallas_call(
        _pool_classify_kernel,
        out_shape=jax.ShapeDtypeStruct((bsz, c), jnp.float32),
        grid_spec=pltpu.PrefetchScalarGridSpec(
            num_scalar_prefetch=0,
            grid=(n // tk,),
            in_specs=[pl.BlockSpec((bsz, tk), lambda k: (0, k)),
                      pl.BlockSpec((tk, hp), lambda k: (k, 0)),
                      pl.BlockSpec((hp, c), lambda k: (0, 0)),
                      pl.BlockSpec((1, c), lambda k: (0, 0))],
            out_specs=pl.BlockSpec((bsz, c), lambda k: (0, 0)),
            scratch_shapes=[pltpu.VMEM((bsz, hp), jnp.float32)]),
        compiler_params=pltpu.CompilerParams(
            dimension_semantics=("arbitrary",)),
    )(pool_mat, h, w, b)


# ---------------------------------------------------------------------------
# Glue (plain JAX / numpy): graph preprocessing + parameters
# ---------------------------------------------------------------------------
def build_normalized_adjacency(edge_index, num_nodes):
    """A_hat = D^{-1/2} (A + I) D^{-1/2}  (GCNConv normalization with self loops).

    Note: like PyG, assumes edge_index is coalesced (no duplicate edges).
    """
    src, dst = edge_index
    a = jnp.zeros((num_nodes, num_nodes), jnp.float32)
    a = a.at[dst, src].add(1.0)                      # message src -> dst
    a = a + jnp.eye(num_nodes, dtype=jnp.float32)    # self loops
    deg = jnp.sum(a, axis=1)
    d_inv_sqrt = jnp.where(deg > 0, 1.0 / jnp.sqrt(deg), 0.0)
    return a * d_inv_sqrt[:, None] * d_inv_sqrt[None, :]


def build_mean_pool_matrix(batch, num_graphs, num_nodes):
    """P[b, n] = 1/|graph b| if batch[n]==b else 0  (global_mean_pool as matmul)."""
    one_hot = (batch[None, :] == jnp.arange(num_graphs)[:, None]).astype(jnp.float32)
    counts = jnp.maximum(one_hot.sum(axis=1, keepdims=True), 1.0)
    return one_hot / counts


def build_block_sparse_meta(a_hat_padded, tm, tk):
    """Per-row-tile nonzero k-block index lists for A_hat (host side, numpy).

    Returns int32 arrays counts[nr] and kidx[nr, max_blocks].  Tail entries of
    each row's list repeat the last nonzero block index so the pipelined DMA
    re-targets an already-resident block (no extra HBM traffic); the kernel
    gates the MXU work with `k < counts[i]`.
    """
    a = np.asarray(a_hat_padded)
    n = a.shape[0]
    nr, nk = n // tm, n // tk
    nz = np.abs(a).reshape(nr, tm, nk, tk).sum(axis=(1, 3)) > 0
    counts = nz.sum(axis=1).astype(np.int32)
    max_blocks = max(int(counts.max()), 1)
    kidx = np.zeros((nr, max_blocks), np.int32)
    for i in range(nr):
        ids = np.nonzero(nz[i])[0]
        if ids.size:
            kidx[i, :ids.size] = ids
            kidx[i, ids.size:] = ids[-1]
    return jnp.asarray(counts), jnp.asarray(kidx)


def init_gcn_params(key, num_features, num_classes, hidden_dim, num_layers,
                    f_pad, h_pad, c_pad):
    conv_w, conv_b, conv_w_pad, conv_b_pad = [], [], [], []
    dims_in = [num_features] + [hidden_dim] * (num_layers - 1)
    for i in range(num_layers):
        key, kw, kb = jax.random.split(key, 3)
        fan_in, fan_out = dims_in[i], hidden_dim
        scale = jnp.sqrt(6.0 / (fan_in + fan_out))          # glorot-uniform-like
        w = jax.random.uniform(kw, (fan_in, fan_out), jnp.float32, -scale, scale)
        b = jax.random.uniform(kb, (1, fan_out), jnp.float32, -0.05, 0.05)
        conv_w.append(w)
        conv_b.append(b)
        in_pad = f_pad if i == 0 else h_pad
        conv_w_pad.append(_pad2(w, in_pad, h_pad).astype(jnp.bfloat16))
        conv_b_pad.append(_pad2(b, 1, h_pad))               # f32 bias, zero-padded
    key, kc, kcb = jax.random.split(key, 3)
    scale = jnp.sqrt(6.0 / (hidden_dim + num_classes))
    cls_w = jax.random.uniform(kc, (hidden_dim, num_classes), jnp.float32, -scale, scale)
    cls_b = jax.random.uniform(kcb, (1, num_classes), jnp.float32, -0.05, 0.05)
    params_pad = {
        "conv_w": conv_w_pad,
        "conv_b": conv_b_pad,
        "cls_w": _pad2(cls_w, h_pad, c_pad).astype(jnp.bfloat16),
        "cls_b": _pad2(cls_b, 1, c_pad),
    }
    params_ref = {"conv_w": conv_w, "conv_b": conv_b, "cls_w": cls_w, "cls_b": cls_b}
    return params_pad, params_ref


@jax.jit
def gcn_forward(params, x, a_hat, counts, kidx, pool_mat):
    # dropout is identity at inference (training=False); nothing to compute.
    h = x
    for w, b in zip(params["conv_w"], params["conv_b"]):
        xw = matmul_bf16(h, w)                         # X @ W   (computed once per layer)
        h = aggregate_relu(counts, kidx, a_hat, xw, b)  # relu(A_hat @ XW + b), block-sparse
    return pool_classify(pool_mat, h, params["cls_w"], params["cls_b"])


def gcn_reference(params, x, a_hat, pool_mat):
    h = x
    for w, b in zip(params["conv_w"], params["conv_b"]):
        h = jnp.maximum(a_hat @ (h @ w) + b, 0.0)
    return (pool_mat @ h) @ params["cls_w"] + params["cls_b"]


# ---------------------------------------------------------------------------
# Demo
# ---------------------------------------------------------------------------
if __name__ == "__main__":
    key = jax.random.PRNGKey(0)

    # Small synthetic batched graph: 2 graphs x 8 nodes = 16 nodes total.
    num_graphs = 2
    nodes_per_graph = 8
    num_nodes = num_graphs * nodes_per_graph
    num_features = 8
    hidden_dim = 32
    num_layers = 3
    num_classes = 4

    key, kx = jax.random.split(key)
    x = jax.random.normal(kx, (num_nodes, num_features), jnp.float32)

    # Undirected ring edges within each graph (both directions), coalesced.
    edges = []
    for g in range(num_graphs):
        base = g * nodes_per_graph
        for i in range(nodes_per_graph):
            a, b = base + i, base + (i + 1) % nodes_per_graph
            edges.append((a, b))
            edges.append((b, a))
    edge_index = jnp.array(edges, jnp.int32).T              # (2, E)
    batch = jnp.repeat(jnp.arange(num_graphs, dtype=jnp.int32), nodes_per_graph)

    a_hat = build_normalized_adjacency(edge_index, num_nodes)        # f32 (N, N)
    pool_mat = build_mean_pool_matrix(batch, num_graphs, num_nodes)  # f32 (B, N)

    # Zero-pad to lane-dense, MXU-friendly sizes.  Node / hidden / class dims go
    # to multiples of 128 (lane-dense outputs); the first-layer feature dim only
    # to a multiple of 16 (bf16 sublane pack) since its K block covers the full
    # dim.  Padding is inert: zero rows/cols in A_hat, P, W, b keep real outputs
    # exact (padded nodes can carry relu(bias) but never leak into real rows).
    n_pad = _round_up(num_nodes, LANE)
    f_pad = max(16, _round_up(num_features, 16))
    h_pad = _round_up(hidden_dim, LANE)
    c_pad = _round_up(num_classes, LANE)
    b_pad = _round_up(num_graphs, 8)

    a_pad_f32 = _pad2(a_hat, n_pad, n_pad)
    tm, tk = aggregate_tiles(n_pad)                  # same tiles the kernel will use
    counts, kidx = build_block_sparse_meta(a_pad_f32, tm, tk)

    a_pad = a_pad_f32.astype(jnp.bfloat16)
    x_pad = _pad2(x, n_pad, f_pad).astype(jnp.bfloat16)
    p_pad = _pad2(pool_mat, b_pad, n_pad).astype(jnp.bfloat16)

    params_pad, params_ref = init_gcn_params(
        key, num_features, num_classes, hidden_dim, num_layers,
        f_pad, h_pad, c_pad)

    out_pad = gcn_forward(params_pad, x_pad, a_pad, counts, kidx, p_pad)
    out_pad = jax.block_until_ready(out_pad)
    out = out_pad[:num_graphs, :num_classes]

    # Pure-JAX f32 reference (loose tolerance: bf16 MXU operands).
    ref = gcn_reference(params_ref, x, a_hat, pool_mat)

    assert out.shape == (num_graphs, num_classes)
    assert bool(jnp.all(jnp.isfinite(out)))
    assert bool(jnp.allclose(out, ref, atol=1e-1, rtol=1e-1)), (
        f"max abs err {float(jnp.max(jnp.abs(out - ref)))}")
    print("KERNEL_OK")
</pallas_src>

<mosaic_0001>
module attributes {stable_mosaic.version = 11 : i64} {
  func.func @_matmul_kernel(%arg0: i32, %arg1: i32, %arg2: i32, %arg3: memref<128x128xbf16, #tpu.memory_space<vmem>>, %arg4: memref<128x128xbf16, #tpu.memory_space<vmem>>, %arg5: memref<128x128xbf16, #tpu.memory_space<vmem>>, %arg6: memref<128x128xf32, #tpu.memory_space<vmem>>) attributes {dimension_semantics = [#tpu.dimension_semantics<parallel>, #tpu.dimension_semantics<parallel>, #tpu.dimension_semantics<arbitrary>], iteration_bounds = array<i64: 1, 1, 1>, scalar_prefetch = 0 : i64, scratch_operands = 1 : i64, tpu.core_type = #tpu.core_type<tc>, window_params = [{transform_indices = @transform_0, window_bounds = array<i64: 128, 128>}, {transform_indices = @transform_1, window_bounds = array<i64: 128, 128>}, {transform_indices = @transform_2, window_bounds = array<i64: 128, 128>}]} {
    %c0_i32 = arith.constant 0 : i32
    %0 = arith.cmpi eq, %arg2, %c0_i32 : i32
    %1 = arith.extui %0 : i1 to i32
    %c0_i32_0 = arith.constant 0 : i32
    %2 = arith.cmpi ne, %1, %c0_i32_0 : i32
    scf.if %2 {
      %cst_10 = arith.constant 0.000000e+00 : f32
      %12 = vector.broadcast %cst_10 : f32 to vector<128x128xf32>
      %c0_11 = arith.constant 0 : index
      %c0_12 = arith.constant 0 : index
      %13 = vector.load %arg6[%c0_11, %c0_12] : memref<128x128xf32, #tpu.memory_space<vmem>>, vector<128x128xf32>
      tpu.vector_store %arg6[%c0_11, %c0_12], %12 {strides = array<i32>} : memref<128x128xf32, #tpu.memory_space<vmem>>, vector<128x128xf32>,
    } else {
    }
    %c0 = arith.constant 0 : index
    %c0_1 = arith.constant 0 : index
    %3 = vector.load %arg6[%c0, %c0_1] : memref<128x128xf32, #tpu.memory_space<vmem>>, vector<128x128xf32>
    %c0_2 = arith.constant 0 : index
    %c0_3 = arith.constant 0 : index
    %4 = vector.load %arg3[%c0_2, %c0_3] : memref<128x128xbf16, #tpu.memory_space<vmem>>, vector<128x128xbf16>
    %c0_4 = arith.constant 0 : index
    %c0_5 = arith.constant 0 : index
    %5 = vector.load %arg4[%c0_4, %c0_5] : memref<128x128xbf16, #tpu.memory_space<vmem>>, vector<128x128xbf16>
    %cst = arith.constant dense<0.000000e+00> : vector<128x128xf32>
    %6 = tpu.matmul %4, %5, %cst {dimension_numbers = #tpu.dot_dimension_numbers<[1], [0], [0], [1], [0, 0, 1, 1], [], []>} : vector<128x128xbf16>, vector<128x128xbf16>, vector<128x128xf32> -> vector<128x128xf32>
    %7 = arith.addf %3, %6 : vector<128x128xf32>
    %c0_6 = arith.constant 0 : index
    %c0_7 = arith.constant 0 : index
    %8 = vector.load %arg6[%c0_6, %c0_7] : memref<128x128xf32, #tpu.memory_space<vmem>>, vector<128x128xf32>
    tpu.vector_store %arg6[%c0_6, %c0_7], %7 {strides = array<i32>} : memref<128x128xf32, #tpu.memory_space<vmem>>, vector<128x128xf32>,
    %c0_i32_8 = arith.constant 0 : i32
    %9 = arith.cmpi eq, %arg2, %c0_i32_8 : i32
    %10 = arith.extui %9 : i1 to i32
    %c0_i32_9 = arith.constant 0 : i32
    %11 = arith.cmpi ne, %10, %c0_i32_9 : i32
    scf.if %11 {
      %c0_10 = arith.constant 0 : index
      %c0_11 = arith.constant 0 : index
      %12 = vector.load %arg6[%c0_10, %c0_11] : memref<128x128xf32, #tpu.memory_space<vmem>>, vector<128x128xf32>
      %13 = arith.truncf %12 : vector<128x128xf32> to vector<128x128xbf16>
      %c0_12 = arith.constant 0 : index
      %c0_13 = arith.constant 0 : index
      %14 = vector.load %arg5[%c0_12, %c0_13] : memref<128x128xbf16, #tpu.memory_space<vmem>>, vector<128x128xbf16>
      tpu.vector_store %arg5[%c0_12, %c0_13], %13 {strides = array<i32>} : memref<128x128xbf16, #tpu.memory_space<vmem>>, vector<128x128xbf16>,
    } else {
    }
    return
  }
  func.func @transform_0(%arg0: i32, %arg1: i32, %arg2: i32) -> (i32, i32) {
    %c0_i32 = arith.constant 0 : i32
    return %arg0, %arg2 : i32, i32
  }
  func.func @transform_1(%arg0: i32, %arg1: i32, %arg2: i32) -> (i32, i32) {
    %c0_i32 = arith.constant 0 : i32
    return %arg2, %arg1 : i32, i32
  }
  func.func @transform_2(%arg0: i32, %arg1: i32, %arg2: i32) -> (i32, i32) {
    %c0_i32 = arith.constant 0 : i32
    return %arg0, %arg1 : i32, i32
  }
}

module attributes {stable_mosaic.version = 11 : i64} {
  func.func @_aggregate_kernel(%arg0: i32, %arg1: i32, %arg2: i32, %arg3: memref<1xi32, #tpu.memory_space<smem>>, %arg4: memref<1x1xi32, #tpu.memory_space<smem>>, %arg5: memref<128x128xbf16, #tpu.memory_space<vmem>>, %arg6: memref<128x128xbf16, #tpu.memory_space<vmem>>, %arg7: memref<1x128xf32, #tpu.memory_space<vmem>>, %arg8: memref<128x128xbf16, #tpu.memory_space<vmem>>, %arg9: memref<128x128xf32, #tpu.memory_space<vmem>>) attributes {dimension_semantics = [#tpu.dimension_semantics<parallel>, #tpu.dimension_semantics<parallel>, #tpu.dimension_semantics<arbitrary>], iteration_bounds = array<i64: 1, 1, 1>, scalar_prefetch = 2 : i64, scratch_operands = 1 : i64, tpu.core_type = #tpu.core_type<tc>, window_params = [{transform_indices = @transform_0, window_bounds = array<i64: 128, 128>}, {transform_indices = @transform_1, window_bounds = array<i64: 128, 128>}, {transform_indices = @transform_2, window_bounds = array<i64: 1, 128>}, {transform_indices = @transform_3, window_bounds = array<i64: 128, 128>}]} {
    %c0_i32 = arith.constant 0 : i32
    %0 = arith.cmpi eq, %arg2, %c0_i32 : i32
    %1 = arith.extui %0 : i1 to i32
    %c0_i32_0 = arith.constant 0 : i32
    %2 = arith.cmpi ne, %1, %c0_i32_0 : i32
    scf.if %2 {
      %c0 = arith.constant 0 : index
      %c0_4 = arith.constant 0 : index
      %11 = vector.load %arg7[%c0, %c0_4] : memref<1x128xf32, #tpu.memory_space<vmem>>, vector<1x128xf32>
      %12 = vector.shape_cast %11 : vector<1x128xf32> to vector<1x128xf32>
      %13 = vector.broadcast %12 : vector<1x128xf32> to vector<128x128xf32>
      %c0_5 = arith.constant 0 : index
      %c0_6 = arith.constant 0 : index
      %14 = vector.load %arg9[%c0_5, %c0_6] : memref<128x128xf32, #tpu.memory_space<vmem>>, vector<128x128xf32>
      tpu.vector_store %arg9[%c0_5, %c0_6], %13 {strides = array<i32>} : memref<128x128xf32, #tpu.memory_space<vmem>>, vector<128x128xf32>,
    } else {
    }
    %3 = arith.index_cast %arg0 : i32 to index
    %4 = memref.load %arg3[%3] : memref<1xi32, #tpu.memory_space<smem>>
    %5 = arith.cmpi slt, %arg2, %4 : i32
    %6 = arith.extui %5 : i1 to i32
    %c0_i32_1 = arith.constant 0 : i32
    %7 = arith.cmpi ne, %6, %c0_i32_1 : i32
    scf.if %7 {
      %c0 = arith.constant 0 : index
      %c0_4 = arith.constant 0 : index
      %11 = vector.load %arg9[%c0, %c0_4] : memref<128x128xf32, #tpu.memory_space<vmem>>, vector<128x128xf32>
      %c0_5 = arith.constant 0 : index
      %c0_6 = arith.constant 0 : index
      %12 = vector.load %arg5[%c0_5, %c0_6] : memref<128x128xbf16, #tpu.memory_space<vmem>>, vector<128x128xbf16>
      %c0_7 = arith.constant 0 : index
      %c0_8 = arith.constant 0 : index
      %13 = vector.load %arg6[%c0_7, %c0_8] : memref<128x128xbf16, #tpu.memory_space<vmem>>, vector<128x128xbf16>
      %cst = arith.constant dense<0.000000e+00> : vector<128x128xf32>
      %14 = tpu.matmul %12, %13, %cst {dimension_numbers = #tpu.dot_dimension_numbers<[1], [0], [0], [1], [0, 0, 1, 1], [], []>} : vector<128x128xbf16>, vector<128x128xbf16>, vector<128x128xf32> -> vector<128x128xf32>
      %15 = arith.addf %11, %14 : vector<128x128xf32>
      %c0_9 = arith.constant 0 : index
      %c0_10 = arith.constant 0 : index
      %16 = vector.load %arg9[%c0_9, %c0_10] : memref<128x128xf32, #tpu.memory_space<vmem>>, vector<128x128xf32>
      tpu.vector_store %arg9[%c0_9, %c0_10], %15 {strides = array<i32>} : memref<128x128xf32, #tpu.memory_space<vmem>>, vector<128x128xf32>,
    } else {
    }
    %c0_i32_2 = arith.constant 0 : i32
    %8 = arith.cmpi eq, %arg2, %c0_i32_2 : i32
    %9 = arith.extui %8 : i1 to i32
    %c0_i32_3 = arith.constant 0 : i32
    %10 = arith.cmpi ne, %9, %c0_i32_3 : i32
    scf.if %10 {
      %c0 = arith.constant 0 : index
      %c0_4 = arith.constant 0 : index
      %11 = vector.load %arg9[%c0, %c0_4] : memref<128x128xf32, #tpu.memory_space<vmem>>, vector<128x128xf32>
      %cst = arith.constant 0.000000e+00 : f32
      %12 = vector.broadcast %cst : f32 to vector<128x128xf32>
      %13 = arith.maximumf %11, %12 : vector<128x128xf32>
      %14 = arith.truncf %13 : vector<128x128xf32> to vector<128x128xbf16>
      %c0_5 = arith.constant 0 : index
      %c0_6 = arith.constant 0 : index
      %15 = vector.load %arg8[%c0_5, %c0_6] : memref<128x128xbf16, #tpu.memory_space<vmem>>, vector<128x128xbf16>
      tpu.vector_store %arg8[%c0_5, %c0_6], %14 {strides = array<i32>} : memref<128x128xbf16, #tpu.memory_space<vmem>>, vector<128x128xbf16>,
    } else {
    }
    return
  }
  func.func @transform_0(%arg0: i32, %arg1: i32, %arg2: i32, %arg3: memref<1xi32, #tpu.memory_space<smem>>, %arg4: memref<1x1xi32, #tpu.memory_space<smem>>) -> (i32, i32) {
    %0 = arith.index_cast %arg0 : i32 to index
    %1 = arith.index_cast %arg2 : i32 to index
    %2 = memref.load %arg4[%0, %1] : memref<1x1xi32, #tpu.memory_space<smem>>
    %c0_i32 = arith.constant 0 : i32
    return %arg0, %2 : i32, i32
  }
  func.func @transform_1(%arg0: i32, %arg1: i32, %arg2: i32, %arg3: memref<1xi32, #tpu.memory_space<smem>>, %arg4: memref<1x1xi32, #tpu.memory_space<smem>>) -> (i32, i32) {
    %0 = arith.index_cast %arg0 : i32 to index
    %1 = arith.index_cast %arg2 : i32 to index
    %2 = memref.load %arg4[%0, %1] : memref<1x1xi32, #tpu.memory_space<smem>>
    %c0_i32 = arith.constant 0 : i32
    return %2, %arg1 : i32, i32
  }
  func.func @transform_2(%arg0: i32, %arg1: i32, %arg2: i32, %arg3: memref<1xi32, #tpu.memory_space<smem>>, %arg4: memref<1x1xi32, #tpu.memory_space<smem>>) -> (i32, i32) {
    %c0_i32 = arith.constant 0 : i32
    %c0_i32_0 = arith.constant 0 : i32
    return %c0_i32, %arg1 : i32, i32
  }
  func.func @transform_3(%arg0: i32, %arg1: i32, %arg2: i32, %arg3: memref<1xi32, #tpu.memory_space<smem>>, %arg4: memref<1x1xi32, #tpu.memory_space<smem>>) -> (i32, i32) {
    %c0_i32 = arith.constant 0 : i32
    return %arg0, %arg1 : i32, i32
  }
}

module attributes {stable_mosaic.version = 11 : i64} {
  func.func @_matmul_kernel(%arg0: i32, %arg1: i32, %arg2: i32, %arg3: memref<128x16xbf16, #tpu.memory_space<vmem>>, %arg4: memref<16x128xbf16, #tpu.memory_space<vmem>>, %arg5: memref<128x128xbf16, #tpu.memory_space<vmem>>, %arg6: memref<128x128xf32, #tpu.memory_space<vmem>>) attributes {dimension_semantics = [#tpu.dimension_semantics<parallel>, #tpu.dimension_semantics<parallel>, #tpu.dimension_semantics<arbitrary>], iteration_bounds = array<i64: 1, 1, 1>, scalar_prefetch = 0 : i64, scratch_operands = 1 : i64, tpu.core_type = #tpu.core_type<tc>, window_params = [{transform_indices = @transform_0, window_bounds = array<i64: 128, 16>}, {transform_indices = @transform_1, window_bounds = array<i64: 16, 128>}, {transform_indices = @transform_2, window_bounds = array<i64: 128, 128>}]} {
    %c0_i32 = arith.constant 0 : i32
    %0 = arith.cmpi eq, %arg2, %c0_i32 : i32
    %1 = arith.extui %0 : i1 to i32
    %c0_i32_0 = arith.constant 0 : i32
    %2 = arith.cmpi ne, %1, %c0_i32_0 : i32
    scf.if %2 {
      %cst_10 = arith.constant 0.000000e+00 : f32
      %12 = vector.broadcast %cst_10 : f32 to vector<128x128xf32>
      %c0_11 = arith.constant 0 : index
      %c0_12 = arith.constant 0 : index
      %13 = vector.load %arg6[%c0_11, %c0_12] : memref<128x128xf32, #tpu.memory_space<vmem>>, vector<128x128xf32>
      tpu.vector_store %arg6[%c0_11, %c0_12], %12 {strides = array<i32>} : memref<128x128xf32, #tpu.memory_space<vmem>>, vector<128x128xf32>,
    } else {
    }
    %c0 = arith.constant 0 : index
    %c0_1 = arith.constant 0 : index
    %3 = vector.load %arg6[%c0, %c0_1] : memref<128x128xf32, #tpu.memory_space<vmem>>, vector<128x128xf32>
    %c0_2 = arith.constant 0 : index
    %c0_3 = arith.constant 0 : index
    %4 = vector.load %arg3[%c0_2, %c0_3] : memref<128x16xbf16, #tpu.memory_space<vmem>>, vector<128x16xbf16>
    %c0_4 = arith.constant 0 : index
    %c0_5 = arith.constant 0 : index
    %5 = vector.load %arg4[%c0_4, %c0_5] : memref<16x128xbf16, #tpu.memory_space<vmem>>, vector<16x128xbf16>
    %cst = arith.constant dense<0.000000e+00> : vector<128x128xf32>
    %6 = tpu.matmul %4, %5, %cst {dimension_numbers = #tpu.dot_dimension_numbers<[1], [0], [0], [1], [0, 0, 1, 1], [], []>} : vector<128x16xbf16>, vector<16x128xbf16>, vector<128x128xf32> -> vector<128x128xf32>
    %7 = arith.addf %3, %6 : vector<128x128xf32>
    %c0_6 = arith.constant 0 : index
    %c0_7 = arith.constant 0 : index
    %8 = vector.load %arg6[%c0_6, %c0_7] : memref<128x128xf32, #tpu.memory_space<vmem>>, vector<128x128xf32>
    tpu.vector_store %arg6[%c0_6, %c0_7], %7 {strides = array<i32>} : memref<128x128xf32, #tpu.memory_space<vmem>>, vector<128x128xf32>,
    %c0_i32_8 = arith.constant 0 : i32
    %9 = arith.cmpi eq, %arg2, %c0_i32_8 : i32
    %10 = arith.extui %9 : i1 to i32
    %c0_i32_9 = arith.constant 0 : i32
    %11 = arith.cmpi ne, %10, %c0_i32_9 : i32
    scf.if %11 {
      %c0_10 = arith.constant 0 : index
      %c0_11 = arith.constant 0 : index
      %12 = vector.load %arg6[%c0_10, %c0_11] : memref<128x128xf32, #tpu.memory_space<vmem>>, vector<128x128xf32>
      %13 = arith.truncf %12 : vector<128x128xf32> to vector<128x128xbf16>
      %c0_12 = arith.constant 0 : index
      %c0_13 = arith.constant 0 : index
      %14 = vector.load %arg5[%c0_12, %c0_13] : memref<128x128xbf16, #tpu.memory_space<vmem>>, vector<128x128xbf16>
      tpu.vector_store %arg5[%c0_12, %c0_13], %13 {strides = array<i32>} : memref<128x128xbf16, #tpu.memory_space<vmem>>, vector<128x128xbf16>,
    } else {
    }
    return
  }
  func.func @transform_0(%arg0: i32, %arg1: i32, %arg2: i32) -> (i32, i32) {
    %c0_i32 = arith.constant 0 : i32
    return %arg0, %arg2 : i32, i32
  }
  func.func @transform_1(%arg0: i32, %arg1: i32, %arg2: i32) -> (i32, i32) {
    %c0_i32 = arith.constant 0 : i32
    return %arg2, %arg1 : i32, i32
  }
  func.func @transform_2(%arg0: i32, %arg1: i32, %arg2: i32) -> (i32, i32) {
    %c0_i32 = arith.constant 0 : i32
    return %arg0, %arg1 : i32, i32
  }
}

module attributes {stable_mosaic.version = 11 : i64} {
  func.func @_pool_classify_kernel(%arg0: i32, %arg1: memref<8x128xbf16, #tpu.memory_space<vmem>>, %arg2: memref<128x128xbf16, #tpu.memory_space<vmem>>, %arg3: memref<128x128xbf16, #tpu.memory_space<vmem>>, %arg4: memref<1x128xf32, #tpu.memory_space<vmem>>, %arg5: memref<8x128xf32, #tpu.memory_space<vmem>>, %arg6: memref<8x128xf32, #tpu.memory_space<vmem>>) attributes {dimension_semantics = [#tpu.dimension_semantics<arbitrary>], iteration_bounds = array<i64: 1>, scalar_prefetch = 0 : i64, scratch_operands = 1 : i64, tpu.core_type = #tpu.core_type<tc>, window_params = [{transform_indices = @transform_0, window_bounds = array<i64: 8, 128>}, {transform_indices = @transform_1, window_bounds = array<i64: 128, 128>}, {pipeline_mode = #tpu.pipeline_mode<synchronous>, transform_indices = @transform_2, window_bounds = array<i64: 128, 128>}, {pipeline_mode = #tpu.pipeline_mode<synchronous>, transform_indices = @transform_3, window_bounds = array<i64: 1, 128>}, {pipeline_mode = #tpu.pipeline_mode<synchronous>, transform_indices = @transform_4, window_bounds = array<i64: 8, 128>}]} {
    %c0_i32 = arith.constant 0 : i32
    %0 = arith.cmpi eq, %arg0, %c0_i32 : i32
    %1 = arith.extui %0 : i1 to i32
    %c0_i32_0 = arith.constant 0 : i32
    %2 = arith.cmpi ne, %1, %c0_i32_0 : i32
    scf.if %2 {
      %cst_10 = arith.constant 0.000000e+00 : f32
      %12 = vector.broadcast %cst_10 : f32 to vector<8x128xf32>
      %c0_11 = arith.constant 0 : index
      %c0_12 = arith.constant 0 : index
      %13 = vector.load %arg6[%c0_11, %c0_12] : memref<8x128xf32, #tpu.memory_space<vmem>>, vector<8x128xf32>
      tpu.vector_store %arg6[%c0_11, %c0_12], %12 {strides = array<i32>} : memref<8x128xf32, #tpu.memory_space<vmem>>, vector<8x128xf32>,
    } else {
    }
    %c0 = arith.constant 0 : index
    %c0_1 = arith.constant 0 : index
    %3 = vector.load %arg6[%c0, %c0_1] : memref<8x128xf32, #tpu.memory_space<vmem>>, vector<8x128xf32>
    %c0_2 = arith.constant 0 : index
    %c0_3 = arith.constant 0 : index
    %4 = vector.load %arg1[%c0_2, %c0_3] : memref<8x128xbf16, #tpu.memory_space<vmem>>, vector<8x128xbf16>
    %c0_4 = arith.constant 0 : index
    %c0_5 = arith.constant 0 : index
    %5 = vector.load %arg2[%c0_4, %c0_5] : memref<128x128xbf16, #tpu.memory_space<vmem>>, vector<128x128xbf16>
    %cst = arith.constant dense<0.000000e+00> : vector<8x128xf32>
    %6 = tpu.matmul %4, %5, %cst {dimension_numbers = #tpu.dot_dimension_numbers<[1], [0], [0], [1], [0, 0, 1, 1], [], []>} : vector<8x128xbf16>, vector<128x128xbf16>, vector<8x128xf32> -> vector<8x128xf32>
    %7 = arith.addf %3, %6 : vector<8x128xf32>
    %c0_6 = arith.constant 0 : index
    %c0_7 = arith.constant 0 : index
    %8 = vector.load %arg6[%c0_6, %c0_7] : memref<8x128xf32, #tpu.memory_space<vmem>>, vector<8x128xf32>
    tpu.vector_store %arg6[%c0_6, %c0_7], %7 {strides = array<i32>} : memref<8x128xf32, #tpu.memory_space<vmem>>, vector<8x128xf32>,
    %c0_i32_8 = arith.constant 0 : i32
    %9 = arith.cmpi eq, %arg0, %c0_i32_8 : i32
    %10 = arith.extui %9 : i1 to i32
    %c0_i32_9 = arith.constant 0 : i32
    %11 = arith.cmpi ne, %10, %c0_i32_9 : i32
    scf.if %11 {
      %c0_10 = arith.constant 0 : index
      %c0_11 = arith.constant 0 : index
      %12 = vector.load %arg6[%c0_10, %c0_11] : memref<8x128xf32, #tpu.memory_space<vmem>>, vector<8x128xf32>
      %13 = arith.truncf %12 : vector<8x128xf32> to vector<8x128xbf16>
      %c0_12 = arith.constant 0 : index
      %c0_13 = arith.constant 0 : index
      %14 = vector.load %arg3[%c0_12, %c0_13] : memref<128x128xbf16, #tpu.memory_space<vmem>>, vector<128x128xbf16>
      %cst_14 = arith.constant dense<0.000000e+00> : vector<8x128xf32>
      %15 = tpu.matmul %13, %14, %cst_14 {dimension_numbers = #tpu.dot_dimension_numbers<[1], [0], [0], [1], [0, 0, 1, 1], [], []>} : vector<8x128xbf16>, vector<128x128xbf16>, vector<8x128xf32> -> vector<8x128xf32>
      %c0_15 = arith.constant 0 : index
      %c0_16 = arith.constant 0 : index
      %16 = vector.load %arg4[%c0_15, %c0_16] : memref<1x128xf32, #tpu.memory_space<vmem>>, vector<1x128xf32>
      %17 = vector.broadcast %16 : vector<1x128xf32> to vector<8x128xf32>
      %18 = arith.addf %15, %17 : vector<8x128xf32>
      %c0_17 = arith.constant 0 : index
      %c0_18 = arith.constant 0 : index
      %19 = vector.load %arg5[%c0_17, %c0_18] : memref<8x128xf32, #tpu.memory_space<vmem>>, vector<8x128xf32>
      tpu.vector_store %arg5[%c0_17, %c0_18], %18 {strides = array<i32>} : memref<8x128xf32, #tpu.memory_space<vmem>>, vector<8x128xf32>,
    } else {
    }
    return
  }
  func.func @transform_0(%arg0: i32) -> (i32, i32) {
    %c0_i32 = arith.constant 0 : i32
    %c0_i32_0 = arith.constant 0 : i32
    return %c0_i32, %arg0 : i32, i32
  }
  func.func @transform_1(%arg0: i32) -> (i32, i32) {
    %c0_i32 = arith.constant 0 : i32
    %c0_i32_0 = arith.constant 0 : i32
    return %arg0, %c0_i32 : i32, i32
  }
  func.func @transform_2(%arg0: i32) -> (i32, i32) {
    %c0_i32 = arith.constant 0 : i32
    %c0_i32_0 = arith.constant 0 : i32
    %c0_i32_1 = arith.constant 0 : i32
    return %c0_i32, %c0_i32_0 : i32, i32
  }
  func.func @transform_3(%arg0: i32) -> (i32, i32) {
    %c0_i32 = arith.constant 0 : i32
    %c0_i32_0 = arith.constant 0 : i32
    %c0_i32_1 = arith.constant 0 : i32
    return %c0_i32, %c0_i32_0 : i32, i32
  }
  func.func @transform_4(%arg0: i32) -> (i32, i32) {
    %c0_i32 = arith.constant 0 : i32
    %c0_i32_0 = arith.constant 0 : i32
    %c0_i32_1 = arith.constant 0 : i32
    return %c0_i32, %c0_i32_0 : i32, i32
  }
}

</mosaic_0001>

<llo_original>
// kernel: gcn_forward.9
$region0: #{gcn_forward.9}
  #allocation0 [shape = 'u32[]', space=smem, size = 0x4, offset = 0x4, fixed_abs, tag = 'smem constant byte address 0x4 - core index']
  #allocation1 [shape = 'u32[144,128]{1,0:T(1,128)}', space=vmem, size = 0x12000, scoped, tag = 'internal scratch']
  #allocation2 [shape = 'f32[128,128]{1,0:T(8,128)}', space=vmem, size = 0x10000, scoped, tag = 'scratch operand']
  %s0 = inlined_call_operand.vmem [shape: bf16[128,128], index: 0, kind: input, shape index: {}]
  %s1 = inlined_call_operand.vmem [shape: bf16[128,128], index: 1, kind: input, shape index: {}]
  %s2 = inlined_call_operand.vmem [shape: bf16[128,128], index: 2, kind: output, shape index: {}]
  %s3 = sld [smem:[#allocation0]]
  $region26: #{gcn_forward.9} parent=0
    _
  %s5 = ssub.s32 1, %s3
  %s6 = scalar_select 0, %s5, %s3
  // Predicated region
  $region2: #{gcn_forward.9} parent=0 // pred_check
    _
  $region3: #{gcn_forward.9} parent=0 // pred_check_branch
    %8 = sbr.rel (0) target = $region5
  $region4: #{gcn_forward.9} parent=0 // pred_region
    _
  $region5: #{gcn_forward.9} parent=0 // pred_fallthru
    _
  // Predicated region
  $region6: #{gcn_forward.9} parent=0 // pred_check
    _
  $region7: #{gcn_forward.9} parent=0 // pred_check_branch
    %10 = sbr.rel (0) target = $region9
  $region8: #{gcn_forward.9} parent=0 // pred_region
    _
  $region9: #{gcn_forward.9} parent=0 // pred_fallthru
    _
  %p12 = scmp.eq.s32.totalorder 0, 0
  // Predicated region
  $region10: #{gcn_forward.9} parent=0 // pred_check
    %p13 = pneg %p12
  $region11: #{gcn_forward.9} parent=0 // pred_check_branch
    %15 = sbr.rel (%p13) target = $region13
  $region12: #{gcn_forward.9} parent=0 // pred_region
    %16 = vst [vmem:[#allocation2] sm:$0xff] 0.0
    %17 = vst [vmem:[#allocation2 + $0x8] sm:$0xff] 0.0
    %18 = vst [vmem:[#allocation2 + $0x10] sm:$0xff] 0.0
    %19 = vst [vmem:[#allocation2 + $0x18] sm:$0xff] 0.0
    %20 = vst [vmem:[#allocation2 + $0x20] sm:$0xff] 0.0
    %21 = vst [vmem:[#allocation2 + $0x28] sm:$0xff] 0.0
    %22 = vst [vmem:[#allocation2 + $0x30] sm:$0xff] 0.0
    %23 = vst [vmem:[#allocation2 + $0x38] sm:$0xff] 0.0
    %24 = vst [vmem:[#allocation2 + $0x40] sm:$0xff] 0.0
    %25 = vst [vmem:[#allocation2 + $0x48] sm:$0xff] 0.0
    %26 = vst [vmem:[#allocation2 + $0x50] sm:$0xff] 0.0
    %27 = vst [vmem:[#allocation2 + $0x58] sm:$0xff] 0.0
    %28 = vst [vmem:[#allocation2 + $0x60] sm:$0xff] 0.0
    %29 = vst [vmem:[#allocation2 + $0x68] sm:$0xff] 0.0
    %30 = vst [vmem:[#allocation2 + $0x70] sm:$0xff] 0.0
    %31 = vst [vmem:[#allocation2 + $0x78] sm:$0xff] 0.0
  $region13: #{gcn_forward.9} parent=0 // pred_fallthru
    _
  %v32 = vld [vmem:[#allocation2] sm:$0xff]
  %v33 = vld [vmem:[#allocation2 + $0x8] sm:$0xff]
  %v34 = vld [vmem:[#allocation2 + $0x10] sm:$0xff]
  %v35 = vld [vmem:[#allocation2 + $0x18] sm:$0xff]
  %v36 = vld [vmem:[#allocation2 + $0x20] sm:$0xff]
  %v37 = vld [vmem:[#allocation2 + $0x28] sm:$0xff]
  %v38 = vld [vmem:[#allocation2 + $0x30] sm:$0xff]
  %v39 = vld [vmem:[#allocation2 + $0x38] sm:$0xff]
  %v40 = vld [vmem:[#allocation2 + $0x40] sm:$0xff]
  %v41 = vld [vmem:[#allocation2 + $0x48] sm:$0xff]
  %v42 = vld [vmem:[#allocation2 + $0x50] sm:$0xff]
  %v43 = vld [vmem:[#allocation2 + $0x58] sm:$0xff]
  %v44 = vld [vmem:[#allocation2 + $0x60] sm:$0xff]
  %v45 = vld [vmem:[#allocation2 + $0x68] sm:$0xff]
  %v46 = vld [vmem:[#allocation2 + $0x70] sm:$0xff]
  %v47 = vld [vmem:[#allocation2 + $0x78] sm:$0xff]
  %v48 = vld [vmem:[%s0] sm:$0xf]
  %v49 = vld [vmem:[%s0 + $0x4] sm:$0xf]
  %v50 = vld [vmem:[%s0 + $0x8] sm:$0xf]
  %v51 = vld [vmem:[%s0 + $0xc] sm:$0xf]
  %v52 = vld [vmem:[%s0 + $0x10] sm:$0xf]
  %v53 = vld [vmem:[%s0 + $0x14] sm:$0xf]
  %v54 = vld [vmem:[%s0 + $0x18] sm:$0xf]
  %v55 = vld [vmem:[%s0 + $0x1c] sm:$0xf]
  %v56 = vld [vmem:[%s0 + $0x20] sm:$0xf]
  %v57 = vld [vmem:[%s0 + $0x24] sm:$0xf]
  %v58 = vld [vmem:[%s0 + $0x28] sm:$0xf]
  %v59 = vld [vmem:[%s0 + $0x2c] sm:$0xf]
  %v60 = vld [vmem:[%s0 + $0x30] sm:$0xf]
  %v61 = vld [vmem:[%s0 + $0x34] sm:$0xf]
  %v62 = vld [vmem:[%s0 + $0x38] sm:$0xf]
  %v63 = vld [vmem:[%s0 + $0x3c] sm:$0xf]
  %v64 = vld [vmem:[%s1] sm:$0xf]
  %v65 = vld [vmem:[%s1 + $0x4] sm:$0xf]
  %v66 = vld [vmem:[%s1 + $0x8] sm:$0xf]
  %v67 = vld [vmem:[%s1 + $0xc] sm:$0xf]
  %v68 = vld [vmem:[%s1 + $0x10] sm:$0xf]
  %v69 = vld [vmem:[%s1 + $0x14] sm:$0xf]
  %v70 = vld [vmem:[%s1 + $0x18] sm:$0xf]
  %v71 = vld [vmem:[%s1 + $0x1c] sm:$0xf]
  %v72 = vld [vmem:[%s1 + $0x20] sm:$0xf]
  %v73 = vld [vmem:[%s1 + $0x24] sm:$0xf]
  %v74 = vld [vmem:[%s1 + $0x28] sm:$0xf]
  %v75 = vld [vmem:[%s1 + $0x2c] sm:$0xf]
  %v76 = vld [vmem:[%s1 + $0x30] sm:$0xf]
  %v77 = vld [vmem:[%s1 + $0x34] sm:$0xf]
  %v78 = vld [vmem:[%s1 + $0x38] sm:$0xf]
  %v79 = vld [vmem:[%s1 + $0x3c] sm:$0xf]
  %v96 = vunpack.c.l.b16 %v48
  %v97 = vunpack.c.l.b16 %v49
  %v98 = vunpack.c.l.b16 %v50
  %v99 = vunpack.c.l.b16 %v51
  %v100 = vunpack.c.l.b16 %v52
  %v101 = vunpack.c.l.b16 %v53
  %v102 = vunpack.c.l.b16 %v54
  %v103 = vunpack.c.l.b16 %v55
  %v104 = vunpack.c.l.b16 %v56
  %v105 = vunpack.c.l.b16 %v57
  %v106 = vunpack.c.l.b16 %v58
  %v107 = vunpack.c.l.b16 %v59
  %v108 = vunpack.c.l.b16 %v60
  %v109 = vunpack.c.l.b16 %v61
  %v110 = vunpack.c.l.b16 %v62
  %v111 = vunpack.c.l.b16 %v63
  %v112 = vpack.c.b16 %v97, %v96
  %v113 = vpack.c.b16 %v99, %v98
  %v114 = vpack.c.b16 %v101, %v100
  %v115 = vpack.c.b16 %v103, %v102
  %v116 = vpack.c.b16 %v105, %v104
  %v117 = vpack.c.b16 %v107, %v106
  %v118 = vpack.c.b16 %v109, %v108
  %v119 = vpack.c.b16 %v111, %v110
  %v144 = vunpack.c.l.b16 %v64
  %v145 = vunpack.c.l.b16 %v65
  %v146 = vunpack.c.l.b16 %v66
  %v147 = vunpack.c.l.b16 %v67
  %v148 = vunpack.c.l.b16 %v68
  %v149 = vunpack.c.l.b16 %v69
  %v150 = vunpack.c.l.b16 %v70
  %v151 = vunpack.c.l.b16 %v71
  %v152 = vunpack.c.l.b16 %v72
  %v153 = vunpack.c.l.b16 %v73
  %v154 = vunpack.c.l.b16 %v74
  %v155 = vunpack.c.l.b16 %v75
  %v156 = vunpack.c.l.b16 %v76
  %v157 = vunpack.c.l.b16 %v77
  %v158 = vunpack.c.l.b16 %v78
  %v159 = vunpack.c.l.b16 %v79
  %v160 = vpack.c.b16 %v145, %v144
  %v161 = vpack.c.b16 %v147, %v146
  %v162 = vpack.c.b16 %v149, %v148
  %v163 = vpack.c.b16 %v151, %v150
  %v164 = vpack.c.b16 %v153, %v152
  %v165 = vpack.c.b16 %v155, %v154
  %v166 = vpack.c.b16 %v157, %v156
  %v167 = vpack.c.b16 %v159, %v158
  %176 = vmatprep.subr.bf16.mxu0 0
  %177 = vmatpush1.bf16.msra.mxu0 %v160
  %178 = vmatprep.subr.bf16.mxu0 0
  %179 = vmatpush1.bf16.msra.mxu0 %v161
  %180 = vmatprep.subr.bf16.mxu0 0
  %181 = vmatpush1.bf16.msra.mxu0 %v162
  %182 = vmatprep.subr.bf16.mxu0 0
  %183 = vmatpush1.bf16.msra.mxu0 %v163
  %184 = vmatprep.subr.bf16.mxu0 0
  %185 = vmatpush1.bf16.msra.mxu0 %v164
  %186 = vmatprep.subr.bf16.mxu0 0
  %187 = vmatpush1.bf16.msra.mxu0 %v165
  %188 = vmatprep.subr.bf16.mxu0 0
  %189 = vmatpush1.bf16.msra.mxu0 %v166
  %190 = vmatprep.subr.bf16.mxu0 0
  %191 = vmatpush1.bf16.msra.mxu0 %v167
  %192 = vmatprep.subr.bf16.mxu0 0
  %193 = vmatpush1.bf16.msra.mxu0 0
  %194 = vmatprep.subr.bf16.mxu0 0
  %195 = vmatpush1.bf16.msra.mxu0 0
  %196 = vmatprep.subr.bf16.mxu0 0
  %197 = vmatpush1.bf16.msra.mxu0 0
  %198 = vmatprep.subr.bf16.mxu0 0
  %199 = vmatpush1.bf16.msra.mxu0 0
  %200 = vmatprep.subr.bf16.mxu0 0
  %201 = vmatpush1.bf16.msra.mxu0 0
  %202 = vmatprep.subr.bf16.mxu0 0
  %203 = vmatpush1.bf16.msra.mxu0 0
  %204 = vmatprep.subr.bf16.mxu0 0
  %205 = vmatpush1.bf16.msra.mxu0 0
  %206 = vmatprep.subr.bf16.mxu0 0
  %207 = vmatpush1.bf16.msra.mxu0 0
  %208 = vmatprep.mubr.bf16.mxu0 0
  %209 = vmatmul.mubr.bf16.gmra.mrb[0].mxu0 %v112
  %v210 = vpop.f32.mrb[0].mxu0
  %v211 = vadd.f32 0.0, %v210
  %v212 = vpop.f32.mrb[0].mxu0
  %v213 = vpop.f32.mrb[0].mxu0
  %v214 = vadd.f32 0.0, %v213
  %v215 = vpop.f32.mrb[0].mxu0
  %216 = vmatprep.mubr.bf16.mxu0 0
  %217 = vmatmul.mubr.bf16.gmra.mrb[0].mxu0 %v113
  %v218 = vpop.f32.mrb[0].mxu0
  %v219 = vadd.f32 0.0, %v218
  %v220 = vpop.f32.mrb[0].mxu0
  %v221 = vpop.f32.mrb[0].mxu0
  %v222 = vadd.f32 0.0, %v221
  %v223 = vpop.f32.mrb[0].mxu0
  %224 = vmatprep.mubr.bf16.mxu0 0
  %225 = vmatmul.mubr.bf16.gmra.mrb[0].mxu0 %v114
  %v226 = vpop.f32.mrb[0].mxu0
  %v227 = vadd.f32 0.0, %v226
  %v228 = vpop.f32.mrb[0].mxu0
  %v229 = vpop.f32.mrb[0].mxu0
  %v230 = vadd.f32 0.0, %v229
  %v231 = vpop.f32.mrb[0].mxu0
  %232 = vmatprep.mubr.bf16.mxu0 0
  %233 = vmatmul.mubr.bf16.gmra.mrb[0].mxu0 %v115
  %v234 = vpop.f32.mrb[0].mxu0
  %v235 = vadd.f32 0.0, %v234
  %v236 = vpop.f32.mrb[0].mxu0
  %v237 = vpop.f32.mrb[0].mxu0
  %v238 = vadd.f32 0.0, %v237
  %v239 = vpop.f32.mrb[0].mxu0
  %240 = vmatprep.mubr.bf16.mxu0 0
  %241 = vmatmul.mubr.bf16.gmra.mrb[0].mxu0 %v116
  %v242 = vpop.f32.mrb[0].mxu0
  %v243 = vadd.f32 0.0, %v242
  %v244 = vpop.f32.mrb[0].mxu0
  %v245 = vpop.f32.mrb[0].mxu0
  %v246 = vadd.f32 0.0, %v245
  %v247 = vpop.f32.mrb[0].mxu0
  %248 = vmatprep.mubr.bf16.mxu0 0
  %249 = vmatmul.mubr.bf16.gmra.mrb[0].mxu0 %v117
  %v250 = vpop.f32.mrb[0].mxu0
  %v251 = vadd.f32 0.0, %v250
  %v252 = vpop.f32.mrb[0].mxu0
  %v253 = vpop.f32.mrb[0].mxu0
  %v254 = vadd.f32 0.0, %v253
  %v255 = vpop.f32.mrb[0].mxu0
  %256 = vmatprep.mubr.bf16.mxu0 0
  %257 = vmatmul.mubr.bf16.gmra.mrb[0].mxu0 %v118
  %v258 = vpop.f32.mrb[0].mxu0
  %v259 = vadd.f32 0.0, %v258
  %v260 = vpop.f32.mrb[0].mxu0
  %v261 = vpop.f32.mrb[0].mxu0
  %v262 = vadd.f32 0.0, %v261
  %v263 = vpop.f32.mrb[0].mxu0
  %264 = vmatprep.mubr.bf16.mxu0 0
  %265 = vmatmul.mubr.bf16.gmra.mrb[0].mxu0 %v119
  %v266 = vpop.f32.mrb[0].mxu0
  %v267 = vadd.f32 0.0, %v266
  %v268 = vpop.f32.mrb[0].mxu0
  %v269 = vpop.f32.mrb[0].mxu0
  %v270 = vadd.f32 0.0, %v269
  %v271 = vpop.f32.mrb[0].mxu0
  %272 = vdwg.mxu0
  %v273 = vadd.f32 %v32, %v211
  %v274 = vadd.f32 %v33, %v214
  %v275 = vadd.f32 %v34, %v219
  %v276 = vadd.f32 %v35, %v222
  %v277 = vadd.f32 %v36, %v227
  %v278 = vadd.f32 %v37, %v230
  %v279 = vadd.f32 %v38, %v235
  %v280 = vadd.f32 %v39, %v238
  %v281 = vadd.f32 %v40, %v243
  %v282 = vadd.f32 %v41, %v246
  %v283 = vadd.f32 %v42, %v251
  %v284 = vadd.f32 %v43, %v254
  %v285 = vadd.f32 %v44, %v259
  %v286 = vadd.f32 %v45, %v262
  %v287 = vadd.f32 %v46, %v267
  %v288 = vadd.f32 %v47, %v270
  %289 = vst [vmem:[#allocation2] sm:$0xff] %v273
  %290 = vst [vmem:[#allocation2 + $0x8] sm:$0xff] %v274
  %291 = vst [vmem:[#allocation2 + $0x10] sm:$0xff] %v275
  %292 = vst [vmem:[#allocation2 + $0x18] sm:$0xff] %v276
  %293 = vst [vmem:[#allocation2 + $0x20] sm:$0xff] %v277
  %294 = vst [vmem:[#allocation2 + $0x28] sm:$0xff] %v278
  %295 = vst [vmem:[#allocation2 + $0x30] sm:$0xff] %v279
  %296 = vst [vmem:[#allocation2 + $0x38] sm:$0xff] %v280
  %297 = vst [vmem:[#allocation2 + $0x40] sm:$0xff] %v281
  %298 = vst [vmem:[#allocation2 + $0x48] sm:$0xff] %v282
  %299 = vst [vmem:[#allocation2 + $0x50] sm:$0xff] %v283
  %300 = vst [vmem:[#allocation2 + $0x58] sm:$0xff] %v284
  %301 = vst [vmem:[#allocation2 + $0x60] sm:$0xff] %v285
  %302 = vst [vmem:[#allocation2 + $0x68] sm:$0xff] %v286
  %303 = vst [vmem:[#allocation2 + $0x70] sm:$0xff] %v287
  %304 = vst [vmem:[#allocation2 + $0x78] sm:$0xff] %v288
  // Predicated region
  $region14: #{gcn_forward.9} parent=0 // pred_check
    %p305 = pneg %p12
  $region15: #{gcn_forward.9} parent=0 // pred_check_branch
    %307 = sbr.rel (%p305) target = $region17
  $region16: #{gcn_forward.9} parent=0 // pred_region
    %v308 = vld [vmem:[#allocation2] sm:$0xff]
    %v309 = vld [vmem:[#allocation2 + $0x8] sm:$0xff]
    %v310 = vld [vmem:[#allocation2 + $0x10] sm:$0xff]
    %v311 = vld [vmem:[#allocation2 + $0x18] sm:$0xff]
    %v312 = vld [vmem:[#allocation2 + $0x20] sm:$0xff]
    %v313 = vld [vmem:[#allocation2 + $0x28] sm:$0xff]
    %v314 = vld [vmem:[#allocation2 + $0x30] sm:$0xff]
    %v315 = vld [vmem:[#allocation2 + $0x38] sm:$0xff]
    %v316 = vld [vmem:[#allocation2 + $0x40] sm:$0xff]
    %v317 = vld [vmem:[#allocation2 + $0x48] sm:$0xff]
    %v318 = vld [vmem:[#allocation2 + $0x50] sm:$0xff]
    %v319 = vld [vmem:[#allocation2 + $0x58] sm:$0xff]
    %v320 = vld [vmem:[#allocation2 + $0x60] sm:$0xff]
    %v321 = vld [vmem:[#allocation2 + $0x68] sm:$0xff]
    %v322 = vld [vmem:[#allocation2 + $0x70] sm:$0xff]
    %v323 = vld [vmem:[#allocation2 + $0x78] sm:$0xff]
    %v324 = vpack.c.bf16 %v309, %v308
    %v325 = vpack.c.bf16 %v311, %v310
    %v326 = vpack.c.bf16 %v313, %v312
    %v327 = vpack.c.bf16 %v315, %v314
    %v328 = vpack.c.bf16 %v317, %v316
    %v329 = vpack.c.bf16 %v319, %v318
    %v330 = vpack.c.bf16 %v321, %v320
    %v331 = vpack.c.bf16 %v323, %v322
    %v340 = vunpack.c.l.b16 %v324
    %v341 = vunpack.c.h.b16 %v324
    %v342 = vunpack.c.l.b16 %v325
    %v343 = vunpack.c.h.b16 %v325
    %v344 = vunpack.c.l.b16 %v326
    %v345 = vunpack.c.h.b16 %v326
    %v346 = vunpack.c.l.b16 %v327
    %v347 = vunpack.c.h.b16 %v327
    %v348 = vunpack.c.l.b16 %v328
    %v349 = vunpack.c.h.b16 %v328
    %v350 = vunpack.c.l.b16 %v329
    %v351 = vunpack.c.h.b16 %v329
    %v352 = vunpack.c.l.b16 %v330
    %v353 = vunpack.c.h.b16 %v330
    %v354 = vunpack.c.l.b16 %v331
    %v355 = vunpack.c.h.b16 %v331
    %v356 = vpack.c.b16 %v340, %v340
    %v357 = vpack.c.b16 %v341, %v341
    %v358 = vpack.c.b16 %v342, %v342
    %v359 = vpack.c.b16 %v343, %v343
    %v360 = vpack.c.b16 %v344, %v344
    %v361 = vpack.c.b16 %v345, %v345
    %v362 = vpack.c.b16 %v346, %v346
    %v363 = vpack.c.b16 %v347, %v347
    %v364 = vpack.c.b16 %v348, %v348
    %v365 = vpack.c.b16 %v349, %v349
    %v366 = vpack.c.b16 %v350, %v350
    %v367 = vpack.c.b16 %v351, %v351
    %v368 = vpack.c.b16 %v352, %v352
    %v369 = vpack.c.b16 %v353, %v353
    %v370 = vpack.c.b16 %v354, %v354
    %v371 = vpack.c.b16 %v355, %v355
    %388 = vst [vmem:[%s2] sm:$0xf] %v356
    %389 = vst [vmem:[%s2 + $0x4] sm:$0xf] %v357
    %390 = vst [vmem:[%s2 + $0x8] sm:$0xf] %v358
    %391 = vst [vmem:[%s2 + $0xc] sm:$0xf] %v359
    %392 = vst [vmem:[%s2 + $0x10] sm:$0xf] %v360
    %393 = vst [vmem:[%s2 + $0x14] sm:$0xf] %v361
    %394 = vst [vmem:[%s2 + $0x18] sm:$0xf] %v362
    %395 = vst [vmem:[%s2 + $0x1c] sm:$0xf] %v363
    %396 = vst [vmem:[%s2 + $0x20] sm:$0xf] %v364
    %397 = vst [vmem:[%s2 + $0x24] sm:$0xf] %v365
    %398 = vst [vmem:[%s2 + $0x28] sm:$0xf] %v366
    %399 = vst [vmem:[%s2 + $0x2c] sm:$0xf] %v367
    %400 = vst [vmem:[%s2 + $0x30] sm:$0xf] %v368
    %401 = vst [vmem:[%s2 + $0x34] sm:$0xf] %v369
    %402 = vst [vmem:[%s2 + $0x38] sm:$0xf] %v370
    %403 = vst [vmem:[%s2 + $0x3c] sm:$0xf] %v371
  $region17: #{gcn_forward.9} parent=0 // pred_fallthru
    _
  // Predicated region
  $region18: #{gcn_forward.9} parent=0 // pred_check
    _
  $region19: #{gcn_forward.9} parent=0 // pred_check_branch
    %405 = sbr.rel (0) target = $region21
  $region20: #{gcn_forward.9} parent=0 // pred_region
    _
  $region21: #{gcn_forward.9} parent=0 // pred_fallthru
    _
  // Predicated region
  $region22: #{gcn_forward.9} parent=0 // pred_check
    _
  $region23: #{gcn_forward.9} parent=0 // pred_check_branch
    %407 = sbr.rel (0) target = $region25
  $region24: #{gcn_forward.9} parent=0 // pred_region
    _
  $region25: #{gcn_forward.9} parent=0 // pred_fallthru
    _

// kernel: gcn_forward.8
$region0: #{gcn_forward.8}
  #allocation0 [shape = 'u32[]', space=smem, size = 0x4, offset = 0x4, fixed_abs, tag = 'smem constant byte address 0x4 - core index']
  #allocation1 [shape = 'u32[144,128]{1,0:T(1,128)}', space=vmem, size = 0x12000, scoped, tag = 'internal scratch']
  #allocation2 [shape = 'f32[128,128]{1,0:T(8,128)}', space=vmem, size = 0x10000, scoped, tag = 'scratch operand']
  #allocation3 [shape = 's32[1]{0}', space=sflag, size = 0x4, scoped, tag = 'scoped memory for gcn_forward.8']
  #allocation4 [shape = 's32[1]{0:T(128)S(6)}', space=smem, size = 0x200, scoped, tag = 'prefetched SMEM operand 0']
  #allocation5 [shape = 's32[1,1]{1,0:T(1,128)S(6)}', space=smem, size = 0x200, scoped, tag = 'prefetched SMEM operand 1']
  %s0 = inlined_call_operand.<no memory space> [shape: s32[1], index: 0, kind: input, shape index: {}]
  %s1 = inlined_call_operand.<no memory space> [shape: s32[1,1], index: 1, kind: input, shape index: {}]
  %s2 = inlined_call_operand.vmem [shape: bf16[128,128], index: 2, kind: input, shape index: {}]
  %s3 = inlined_call_operand.vmem [shape: bf16[128,128], index: 3, kind: input, shape index: {}]
  %s4 = inlined_call_operand.vmem [shape: f32[1,128], index: 4, kind: input, shape index: {}]
  %s5 = inlined_call_operand.vmem [shape: bf16[128,128], index: 5, kind: output, shape index: {}]
  %s6 = sld [smem:[#allocation0]]
  $region34: #{gcn_forward.8} parent=0
    _
  %s8 = ssub.s32 1, %s6
  %s9 = scalar_select 0, %s8, %s6
  %10 = sst [smem:[#allocation4]] %s0
  %11 = sst [smem:[#allocation5]] %s1
  // Predicated region
  $region2: #{gcn_forward.8} parent=0 // pred_check
    _
  $region3: #{gcn_forward.8} parent=0 // pred_check_branch
    %13 = sbr.rel (0) target = $region5
  $region4: #{gcn_forward.8} parent=0 // pred_region
    %s14 = sadd.s32 0, 0
    %s15 = smul.u32 %s14, 128
    %s16 = sadd.s32 %s15, 0
    %s17 = sld [smem:[#allocation5 + %s16]]
    %p18 = scmp.lt.s32.totalorder %s17, 0
    %s19 = scalar_select %p18, %s17, 0
    %s20 = smul.addr %s19, 4
    %s21 = scalar_lea.vmem %s2, %s20
    %s22 = sadd.s32 0, 0
    %s23 = smul.u32 %s22, 128
    %s24 = sadd.s32 %s23, 0
    %s25 = sld [smem:[#allocation5 + %s24]]
  $region5: #{gcn_forward.8} parent=0 // pred_fallthru
    _
  // Predicated region
  $region6: #{gcn_forward.8} parent=0 // pred_check
    _
  $region7: #{gcn_forward.8} parent=0 // pred_check_branch
    %27 = sbr.rel (0) target = $region9
  $region8: #{gcn_forward.8} parent=0 // pred_region
    %s28 = sadd.s32 0, 0
    %s29 = smul.u32 %s28, 128
    %s30 = sadd.s32 %s29, 0
    %s31 = sld [smem:[#allocation5 + %s30]]
    %s32 = smul.u32 16, %s31
    %p33 = scmp.lt.s32.totalorder %s32, 15
    %s34 = scalar_select %p33, %s32, 15
    %s35 = smul.addr %s34, 4
    %s36 = scalar_lea.vmem %s3, %s35
    %s37 = sadd.s32 0, 0
    %s38 = smul.u32 %s37, 128
    %s39 = sadd.s32 %s38, 0
    %s40 = sld [smem:[#allocation5 + %s39]]
    %s41 = smul.u32 16, %s40
  $region9: #{gcn_forward.8} parent=0 // pred_fallthru
    _
  // Predicated region
  $region10: #{gcn_forward.8} parent=0 // pred_check
    _
  $region11: #{gcn_forward.8} parent=0 // pred_check_branch
    %43 = sbr.rel (0) target = $region13
  $region12: #{gcn_forward.8} parent=0 // pred_region
    _
  $region13: #{gcn_forward.8} parent=0 // pred_fallthru
    _
  %s44 = sadd.s32 0, 0
  %s45 = smul.u32 %s44, 128
  %s46 = sadd.s32 %s45, 0
  %s47 = sld [smem:[#allocation5 + %s46]]
  %p48 = scmp.lt.s32.totalorder %s47, 0
  %s49 = scalar_select %p48, %s47, 0
  %s50 = smul.addr %s49, 4
  %s51 = scalar_lea.vmem %s2, %s50
  %s52 = sadd.s32 0, 0
  %s53 = smul.u32 %s52, 128
  %s54 = sadd.s32 %s53, 0
  %s55 = sld [smem:[#allocation5 + %s54]]
  %s56 = smul.u32 16, %s55
  %p57 = scmp.lt.s32.totalorder %s56, 15
  %s58 = scalar_select %p57, %s56, 15
  %s59 = smul.addr %s58, 4
  %s60 = scalar_lea.vmem %s3, %s59
  %s61 = sadd.s32 0, 0
  %s62 = smul.u32 %s61, 128
  %s63 = sadd.s32 %s62, 0
  %s64 = sld [smem:[#allocation5 + %s63]]
  %p65 = scmp.lt.s32.totalorder %s64, 0
  %s66 = scalar_select %p65, %s64, 0
  %s67 = smul.addr %s66, 4
  %s68 = scalar_lea.vmem %s2, %s67
  %s69 = sadd.s32 0, 0
  %s70 = smul.u32 %s69, 128
  %s71 = sadd.s32 %s70, 0
  %s72 = sld [smem:[#allocation5 + %s71]]
  %s73 = sadd.s32 0, 0
  %s74 = smul.u32 %s73, 128
  %s75 = sadd.s32 %s74, 0
  %s76 = sld [smem:[#allocation5 + %s75]]
  %s77 = smul.u32 16, %s76
  %p78 = scmp.lt.s32.totalorder %s77, 15
  %s79 = scalar_select %p78, %s77, 15
  %s80 = smul.addr %s79, 4
  %s81 = scalar_lea.vmem %s3, %s80
  %s82 = sadd.s32 0, 0
  %s83 = smul.u32 %s82, 128
  %s84 = sadd.s32 %s83, 0
  %s85 = sld [smem:[#allocation5 + %s84]]
  %s86 = smul.u32 16, %s85
  %p88 = scmp.eq.s32.totalorder 0, 0
  // Predicated region
  $region14: #{gcn_forward.8} parent=0 // pred_check
    %p89 = pneg %p88
  $region15: #{gcn_forward.8} parent=0 // pred_check_branch
    %91 = sbr.rel (%p89) target = $region17
  $region16: #{gcn_forward.8} parent=0 // pred_region
    %v92 = vld [vmem:[%s4] sm:$0x1]
    %v94 = vlaneseq
    %v95 = vshrl.u32 %v94, 7
    %v96 = vsub.s32 0, %v95
    %v97 = vrot.slane %v92, %v96
    %99 = vst [vmem:[#allocation2] sm:$0xff] %v97
    %100 = vst [vmem:[#allocation2 + $0x8] sm:$0xff] %v97
    %101 = vst [vmem:[#allocation2 + $0x10] sm:$0xff] %v97
    %102 = vst [vmem:[#allocation2 + $0x18] sm:$0xff] %v97
    %103 = vst [vmem:[#allocation2 + $0x20] sm:$0xff] %v97
    %104 = vst [vmem:[#allocation2 + $0x28] sm:$0xff] %v97
    %105 = vst [vmem:[#allocation2 + $0x30] sm:$0xff] %v97
    %106 = vst [vmem:[#allocation2 + $0x38] sm:$0xff] %v97
    %107 = vst [vmem:[#allocation2 + $0x40] sm:$0xff] %v97
    %108 = vst [vmem:[#allocation2 + $0x48] sm:$0xff] %v97
    %109 = vst [vmem:[#allocation2 + $0x50] sm:$0xff] %v97
    %110 = vst [vmem:[#allocation2 + $0x58] sm:$0xff] %v97
    %111 = vst [vmem:[#allocation2 + $0x60] sm:$0xff] %v97
    %112 = vst [vmem:[#allocation2 + $0x68] sm:$0xff] %v97
    %113 = vst [vmem:[#allocation2 + $0x70] sm:$0xff] %v97
    %114 = vst [vmem:[#allocation2 + $0x78] sm:$0xff] %v97
  $region17: #{gcn_forward.8} parent=0 // pred_fallthru
    _
  %s115 = sld [smem:[#allocation4]]
  %p116 = scmp.lt.s32.totalorder 0, %s115
  // Predicated region
  $region18: #{gcn_forward.8} parent=0 // pred_check
    %p117 = pneg %p116
  $region19: #{gcn_forward.8} parent=0 // pred_check_branch
    %119 = sbr.rel (%p117) target = $region21
  $region20: #{gcn_forward.8} parent=0 // pred_region
    %v120 = vld [vmem:[#allocation2] sm:$0xff]
    %v121 = vld [vmem:[#allocation2 + $0x8] sm:$0xff]
    %v122 = vld [vmem:[#allocation2 + $0x10] sm:$0xff]
    %v123 = vld [vmem:[#allocation2 + $0x18] sm:$0xff]
    %v124 = vld [vmem:[#allocation2 + $0x20] sm:$0xff]
    %v125 = vld [vmem:[#allocation2 + $0x28] sm:$0xff]
    %v126 = vld [vmem:[#allocation2 + $0x30] sm:$0xff]
    %v127 = vld [vmem:[#allocation2 + $0x38] sm:$0xff]
    %v128 = vld [vmem:[#allocation2 + $0x40] sm:$0xff]
    %v129 = vld [vmem:[#allocation2 + $0x48] sm:$0xff]
    %v130 = vld [vmem:[#allocation2 + $0x50] sm:$0xff]
    %v131 = vld [vmem:[#allocation2 + $0x58] sm:$0xff]
    %v132 = vld [vmem:[#allocation2 + $0x60] sm:$0xff]
    %v133 = vld [vmem:[#allocation2 + $0x68] sm:$0xff]
    %v134 = vld [vmem:[#allocation2 + $0x70] sm:$0xff]
    %v135 = vld [vmem:[#allocation2 + $0x78] sm:$0xff]
    %v136 = vld [vmem:[%s68] sm:$0xf]
    %v137 = vld [vmem:[%s68 + $0x4] sm:$0xf]
    %v138 = vld [vmem:[%s68 + $0x8] sm:$0xf]
    %v139 = vld [vmem:[%s68 + $0xc] sm:$0xf]
    %v140 = vld [vmem:[%s68 + $0x10] sm:$0xf]
    %v141 = vld [vmem:[%s68 + $0x14] sm:$0xf]
    %v142 = vld [vmem:[%s68 + $0x18] sm:$0xf]
    %v143 = vld [vmem:[%s68 + $0x1c] sm:$0xf]
    %v144 = vld [vmem:[%s68 + $0x20] sm:$0xf]
    %v145 = vld [vmem:[%s68 + $0x24] sm:$0xf]
    %v146 = vld [vmem:[%s68 + $0x28] sm:$0xf]
    %v147 = vld [vmem:[%s68 + $0x2c] sm:$0xf]
    %v148 = vld [vmem:[%s68 + $0x30] sm:$0xf]
    %v149 = vld [vmem:[%s68 + $0x34] sm:$0xf]
    %v150 = vld [vmem:[%s68 + $0x38] sm:$0xf]
    %v151 = vld [vmem:[%s68 + $0x3c] sm:$0xf]
    %v152 = vld [vmem:[%s81] sm:$0xf]
    %v153 = vld [vmem:[%s81 + $0x4] sm:$0xf]
    %v154 = vld [vmem:[%s81 + $0x8] sm:$0xf]
    %v155 = vld [vmem:[%s81 + $0xc] sm:$0xf]
    %v156 = vld [vmem:[%s81 + $0x10] sm:$0xf]
    %v157 = vld [vmem:[%s81 + $0x14] sm:$0xf]
    %v158 = vld [vmem:[%s81 + $0x18] sm:$0xf]
    %v159 = vld [vmem:[%s81 + $0x1c] sm:$0xf]
    %v160 = vld [vmem:[%s81 + $0x20] sm:$0xf]
    %v161 = vld [vmem:[%s81 + $0x24] sm:$0xf]
    %v162 = vld [vmem:[%s81 + $0x28] sm:$0xf]
    %v163 = vld [vmem:[%s81 + $0x2c] sm:$0xf]
    %v164 = vld [vmem:[%s81 + $0x30] sm:$0xf]
    %v165 = vld [vmem:[%s81 + $0x34] sm:$0xf]
    %v166 = vld [vmem:[%s81 + $0x38] sm:$0xf]
    %v167 = vld [vmem:[%s81 + $0x3c] sm:$0xf]
    %v184 = vunpack.c.l.b16 %v136
    %v185 = vunpack.c.l.b16 %v137
    %v186 = vunpack.c.l.b16 %v138
    %v187 = vunpack.c.l.b16 %v139
    %v188 = vunpack.c.l.b16 %v140
    %v189 = vunpack.c.l.b16 %v141
    %v190 = vunpack.c.l.b16 %v142
    %v191 = vunpack.c.l.b16 %v143
    %v192 = vunpack.c.l.b16 %v144
    %v193 = vunpack.c.l.b16 %v145
    %v194 = vunpack.c.l.b16 %v146
    %v195 = vunpack.c.l.b16 %v147
    %v196 = vunpack.c.l.b16 %v148
    %v197 = vunpack.c.l.b16 %v149
    %v198 = vunpack.c.l.b16 %v150
    %v199 = vunpack.c.l.b16 %v151
    %v200 = vpack.c.b16 %v185, %v184
    %v201 = vpack.c.b16 %v187, %v186
    %v202 = vpack.c.b16 %v189, %v188
    %v203 = vpack.c.b16 %v191, %v190
    %v204 = vpack.c.b16 %v193, %v192
    %v205 = vpack.c.b16 %v195, %v194
    %v206 = vpack.c.b16 %v197, %v196
    %v207 = vpack.c.b16 %v199, %v198
    %v232 = vunpack.c.l.b16 %v152
    %v233 = vunpack.c.l.b16 %v153
    %v234 = vunpack.c.l.b16 %v154
    %v235 = vunpack.c.l.b16 %v155
    %v236 = vunpack.c.l.b16 %v156
    %v237 = vunpack.c.l.b16 %v157
    %v238 = vunpack.c.l.b16 %v158
    %v239 = vunpack.c.l.b16 %v159
    %v240 = vunpack.c.l.b16 %v160
    %v241 = vunpack.c.l.b16 %v161
    %v242 = vunpack.c.l.b16 %v162
    %v243 = vunpack.c.l.b16 %v163
    %v244 = vunpack.c.l.b16 %v164
    %v245 = vunpack.c.l.b16 %v165
    %v246 = vunpack.c.l.b16 %v166
    %v247 = vunpack.c.l.b16 %v167
    %v248 = vpack.c.b16 %v233, %v232
    %v249 = vpack.c.b16 %v235, %v234
    %v250 = vpack.c.b16 %v237, %v236
    %v251 = vpack.c.b16 %v239, %v238
    %v252 = vpack.c.b16 %v241, %v240
    %v253 = vpack.c.b16 %v243, %v242
    %v254 = vpack.c.b16 %v245, %v244
    %v255 = vpack.c.b16 %v247, %v246
    %264 = vmatprep.subr.bf16.mxu0 0
    %265 = vmatpush1.bf16.msra.mxu0 %v248
    %266 = vmatprep.subr.bf16.mxu0 0
    %267 = vmatpush1.bf16.msra.mxu0 %v249
    %268 = vmatprep.subr.bf16.mxu0 0
    %269 = vmatpush1.bf16.msra.mxu0 %v250
    %270 = vmatprep.subr.bf16.mxu0 0
    %271 = vmatpush1.bf16.msra.mxu0 %v251
    %272 = vmatprep.subr.bf16.mxu0 0
    %273 = vmatpush1.bf16.msra.mxu0 %v252
    %274 = vmatprep.subr.bf16.mxu0 0
    %275 = vmatpush1.bf16.msra.mxu0 %v253
    %276 = vmatprep.subr.bf16.mxu0 0
    %277 = vmatpush1.bf16.msra.mxu0 %v254
    %278 = vmatprep.subr.bf16.mxu0 0
    %279 = vmatpush1.bf16.msra.mxu0 %v255
    %280 = vmatprep.subr.bf16.mxu0 0
    %281 = vmatpush1.bf16.msra.mxu0 0
    %282 = vmatprep.subr.bf16.mxu0 0
    %283 = vmatpush1.bf16.msra.mxu0 0
    %284 = vmatprep.subr.bf16.mxu0 0
    %285 = vmatpush1.bf16.msra.mxu0 0
    %286 = vmatprep.subr.bf16.mxu0 0
    %287 = vmatpush1.bf16.msra.mxu0 0
    %288 = vmatprep.subr.bf16.mxu0 0
    %289 = vmatpush1.bf16.msra.mxu0 0
    %290 = vmatprep.subr.bf16.mxu0 0
    %291 = vmatpush1.bf16.msra.mxu0 0
    %292 = vmatprep.subr.bf16.mxu0 0
    %293 = vmatpush1.bf16.msra.mxu0 0
    %294 = vmatprep.subr.bf16.mxu0 0
    %295 = vmatpush1.bf16.msra.mxu0 0
    %296 = vmatprep.mubr.bf16.mxu0 0
    %297 = vmatmul.mubr.bf16.gmra.mrb[0].mxu0 %v200
    %v298 = vpop.f32.mrb[0].mxu0
    %v299 = vadd.f32 0.0, %v298
    %v300 = vpop.f32.mrb[0].mxu0
    %v301 = vpop.f32.mrb[0].mxu0
    %v302 = vadd.f32 0.0, %v301
    %v303 = vpop.f32.mrb[0].mxu0
    %304 = vmatprep.mubr.bf16.mxu0 0
    %305 = vmatmul.mubr.bf16.gmra.mrb[0].mxu0 %v201
    %v306 = vpop.f32.mrb[0].mxu0
    %v307 = vadd.f32 0.0, %v306
    %v308 = vpop.f32.mrb[0].mxu0
    %v309 = vpop.f32.mrb[0].mxu0
    %v310 = vadd.f32 0.0, %v309
    %v311 = vpop.f32.mrb[0].mxu0
    %312 = vmatprep.mubr.bf16.mxu0 0
    %313 = vmatmul.mubr.bf16.gmra.mrb[0].mxu0 %v202
    %v314 = vpop.f32.mrb[0].mxu0
    %v315 = vadd.f32 0.0, %v314
    %v316 = vpop.f32.mrb[0].mxu0
    %v317 = vpop.f32.mrb[0].mxu0
    %v318 = vadd.f32 0.0, %v317
    %v319 = vpop.f32.mrb[0].mxu0
    %320 = vmatprep.mubr.bf16.mxu0 0
    %321 = vmatmul.mubr.bf16.gmra.mrb[0].mxu0 %v203
    %v322 = vpop.f32.mrb[0].mxu0
    %v323 = vadd.f32 0.0, %v322
    %v324 = vpop.f32.mrb[0].mxu0
    %v325 = vpop.f32.mrb[0].mxu0
    %v326 = vadd.f32 0.0, %v325
    %v327 = vpop.f32.mrb[0].mxu0
    %328 = vmatprep.mubr.bf16.mxu0 0
    %329 = vmatmul.mubr.bf16.gmra.mrb[0].mxu0 %v204
    %v330 = vpop.f32.mrb[0].mxu0
    %v331 = vadd.f32 0.0, %v330
    %v332 = vpop.f32.mrb[0].mxu0
    %v333 = vpop.f32.mrb[0].mxu0
    %v334 = vadd.f32 0.0, %v333
    %v335 = vpop.f32.mrb[0].mxu0
    %336 = vmatprep.mubr.bf16.mxu0 0
    %337 = vmatmul.mubr.bf16.gmra.mrb[0].mxu0 %v205
    %v338 = vpop.f32.mrb[0].mxu0
    %v339 = vadd.f32 0.0, %v338
    %v340 = vpop.f32.mrb[0].mxu0
    %v341 = vpop.f32.mrb[0].mxu0
    %v342 = vadd.f32 0.0, %v341
    %v343 = vpop.f32.mrb[0].mxu0
    %344 = vmatprep.mubr.bf16.mxu0 0
    %345 = vmatmul.mubr.bf16.gmra.mrb[0].mxu0 %v206
    %v346 = vpop.f32.mrb[0].mxu0
    %v347 = vadd.f32 0.0, %v346
    %v348 = vpop.f32.mrb[0].mxu0
    %v349 = vpop.f32.mrb[0].mxu0
    %v350 = vadd.f32 0.0, %v349
    %v351 = vpop.f32.mrb[0].mxu0
    %352 = vmatprep.mubr.bf16.mxu0 0
    %353 = vmatmul.mubr.bf16.gmra.mrb[0].mxu0 %v207
    %v354 = vpop.f32.mrb[0].mxu0
    %v355 = vadd.f32 0.0, %v354
    %v356 = vpop.f32.mrb[0].mxu0
    %v357 = vpop.f32.mrb[0].mxu0
    %v358 = vadd.f32 0.0, %v357
    %v359 = vpop.f32.mrb[0].mxu0
    %360 = vdwg.mxu0
    %v361 = vadd.f32 %v120, %v299
    %v362 = vadd.f32 %v121, %v302
    %v363 = vadd.f32 %v122, %v307
    %v364 = vadd.f32 %v123, %v310
    %v365 = vadd.f32 %v124, %v315
    %v366 = vadd.f32 %v125, %v318
    %v367 = vadd.f32 %v126, %v323
    %v368 = vadd.f32 %v127, %v326
    %v369 = vadd.f32 %v128, %v331
    %v370 = vadd.f32 %v129, %v334
    %v371 = vadd.f32 %v130, %v339
    %v372 = vadd.f32 %v131, %v342
    %v373 = vadd.f32 %v132, %v347
    %v374 = vadd.f32 %v133, %v350
    %v375 = vadd.f32 %v134, %v355
    %v376 = vadd.f32 %v135, %v358
    %377 = vst [vmem:[#allocation2] sm:$0xff] %v361
    %378 = vst [vmem:[#allocation2 + $0x8] sm:$0xff] %v362
    %379 = vst [vmem:[#allocation2 + $0x10] sm:$0xff] %v363
    %380 = vst [vmem:[#allocation2 + $0x18] sm:$0xff] %v364
    %381 = vst [vmem:[#allocation2 + $0x20] sm:$0xff] %v365
    %382 = vst [vmem:[#allocation2 + $0x28] sm:$0xff] %v366
    %383 = vst [vmem:[#allocation2 + $0x30] sm:$0xff] %v367
    %384 = vst [vmem:[#allocation2 + $0x38] sm:$0xff] %v368
    %385 = vst [vmem:[#allocation2 + $0x40] sm:$0xff] %v369
    %386 = vst [vmem:[#allocation2 + $0x48] sm:$0xff] %v370
    %387 = vst [vmem:[#allocation2 + $0x50] sm:$0xff] %v371
    %388 = vst [vmem:[#allocation2 + $0x58] sm:$0xff] %v372
    %389 = vst [vmem:[#allocation2 + $0x60] sm:$0xff] %v373
    %390 = vst [vmem:[#allocation2 + $0x68] sm:$0xff] %v374
    %391 = vst [vmem:[#allocation2 + $0x70] sm:$0xff] %v375
    %392 = vst [vmem:[#allocation2 + $0x78] sm:$0xff] %v376
  $region21: #{gcn_forward.8} parent=0 // pred_fallthru
    _
  // Predicated region
  $region22: #{gcn_forward.8} parent=0 // pred_check
    %p393 = pneg %p88
  $region23: #{gcn_forward.8} parent=0 // pred_check_branch
    %395 = sbr.rel (%p393) target = $region25
  $region24: #{gcn_forward.8} parent=0 // pred_region
    %v396 = vld [vmem:[#allocation2] sm:$0xff]
    %v397 = vld [vmem:[#allocation2 + $0x8] sm:$0xff]
    %v398 = vld [vmem:[#allocation2 + $0x10] sm:$0xff]
    %v399 = vld [vmem:[#allocation2 + $0x18] sm:$0xff]
    %v400 = vld [vmem:[#allocation2 + $0x20] sm:$0xff]
    %v401 = vld [vmem:[#allocation2 + $0x28] sm:$0xff]
    %v402 = vld [vmem:[#allocation2 + $0x30] sm:$0xff]
    %v403 = vld [vmem:[#allocation2 + $0x38] sm:$0xff]
    %v404 = vld [vmem:[#allocation2 + $0x40] sm:$0xff]
    %v405 = vld [vmem:[#allocation2 + $0x48] sm:$0xff]
    %v406 = vld [vmem:[#allocation2 + $0x50] sm:$0xff]
    %v407 = vld [vmem:[#allocation2 + $0x58] sm:$0xff]
    %v408 = vld [vmem:[#allocation2 + $0x60] sm:$0xff]
    %v409 = vld [vmem:[#allocation2 + $0x68] sm:$0xff]
    %v410 = vld [vmem:[#allocation2 + $0x70] sm:$0xff]
    %v411 = vld [vmem:[#allocation2 + $0x78] sm:$0xff]
    %v412 = vmax.f32 %v396, 0.0
    %v413 = vmax.f32 %v397, 0.0
    %v414 = vmax.f32 %v398, 0.0
    %v415 = vmax.f32 %v399, 0.0
    %v416 = vmax.f32 %v400, 0.0
    %v417 = vmax.f32 %v401, 0.0
    %v418 = vmax.f32 %v402, 0.0
    %v419 = vmax.f32 %v403, 0.0
    %v420 = vmax.f32 %v404, 0.0
    %v421 = vmax.f32 %v405, 0.0
    %v422 = vmax.f32 %v406, 0.0
    %v423 = vmax.f32 %v407, 0.0
    %v424 = vmax.f32 %v408, 0.0
    %v425 = vmax.f32 %v409, 0.0
    %v426 = vmax.f32 %v410, 0.0
    %v427 = vmax.f32 %v411, 0.0
    %v428 = vpack.c.bf16 %v413, %v412
    %v429 = vpack.c.bf16 %v415, %v414
    %v430 = vpack.c.bf16 %v417, %v416
    %v431 = vpack.c.bf16 %v419, %v418
    %v432 = vpack.c.bf16 %v421, %v420
    %v433 = vpack.c.bf16 %v423, %v422
    %v434 = vpack.c.bf16 %v425, %v424
    %v435 = vpack.c.bf16 %v427, %v426
    %v444 = vunpack.c.l.b16 %v428
    %v445 = vunpack.c.h.b16 %v428
    %v446 = vunpack.c.l.b16 %v429
    %v447 = vunpack.c.h.b16 %v429
    %v448 = vunpack.c.l.b16 %v430
    %v449 = vunpack.c.h.b16 %v430
    %v450 = vunpack.c.l.b16 %v431
    %v451 = vunpack.c.h.b16 %v431
    %v452 = vunpack.c.l.b16 %v432
    %v453 = vunpack.c.h.b16 %v432
    %v454 = vunpack.c.l.b16 %v433
    %v455 = vunpack.c.h.b16 %v433
    %v456 = vunpack.c.l.b16 %v434
    %v457 = vunpack.c.h.b16 %v434
    %v458 = vunpack.c.l.b16 %v435
    %v459 = vunpack.c.h.b16 %v435
    %v460 = vpack.c.b16 %v444, %v444
    %v461 = vpack.c.b16 %v445, %v445
    %v462 = vpack.c.b16 %v446, %v446
    %v463 = vpack.c.b16 %v447, %v447
    %v464 = vpack.c.b16 %v448, %v448
    %v465 = vpack.c.b16 %v449, %v449
    %v466 = vpack.c.b16 %v450, %v450
    %v467 = vpack.c.b16 %v451, %v451
    %v468 = vpack.c.b16 %v452, %v452
    %v469 = vpack.c.b16 %v453, %v453
    %v470 = vpack.c.b16 %v454, %v454
    %v471 = vpack.c.b16 %v455, %v455
    %v472 = vpack.c.b16 %v456, %v456
    %v473 = vpack.c.b16 %v457, %v457
    %v474 = vpack.c.b16 %v458, %v458
    %v475 = vpack.c.b16 %v459, %v459
    %492 = vst [vmem:[%s5] sm:$0xf] %v460
    %493 = vst [vmem:[%s5 + $0x4] sm:$0xf] %v461
    %494 = vst [vmem:[%s5 + $0x8] sm:$0xf] %v462
    %495 = vst [vmem:[%s5 + $0xc] sm:$0xf] %v463
    %496 = vst [vmem:[%s5 + $0x10] sm:$0xf] %v464
    %497 = vst [vmem:[%s5 + $0x14] sm:$0xf] %v465
    %498 = vst [vmem:[%s5 + $0x18] sm:$0xf] %v466
    %499 = vst [vmem:[%s5 + $0x1c] sm:$0xf] %v467
    %500 = vst [vmem:[%s5 + $0x20] sm:$0xf] %v468
    %501 = vst [vmem:[%s5 + $0x24] sm:$0xf] %v469
    %502 = vst [vmem:[%s5 + $0x28] sm:$0xf] %v470
    %503 = vst [vmem:[%s5 + $0x2c] sm:$0xf] %v471
    %504 = vst [vmem:[%s5 + $0x30] sm:$0xf] %v472
    %505 = vst [vmem:[%s5 + $0x34] sm:$0xf] %v473
    %506 = vst [vmem:[%s5 + $0x38] sm:$0xf] %v474
    %507 = vst [vmem:[%s5 + $0x3c] sm:$0xf] %v475
  $region25: #{gcn_forward.8} parent=0 // pred_fallthru
    _
  // Predicated region
  $region26: #{gcn_forward.8} parent=0 // pred_check
    _
  $region27: #{gcn_forward.8} parent=0 // pred_check_branch
    %509 = sbr.rel (0) target = $region29
  $region28: #{gcn_forward.8} parent=0 // pred_region
    _
  $region29: #{gcn_forward.8} parent=0 // pred_fallthru
    _
  // Predicated region
  $region30: #{gcn_forward.8} parent=0 // pred_check
    _
  $region31: #{gcn_forward.8} parent=0 // pred_check_branch
    %511 = sbr.rel (0) target = $region33
  $region32: #{gcn_forward.8} parent=0 // pred_region
    _
  $region33: #{gcn_forward.8} parent=0 // pred_fallthru
    _

// kernel: gcn_forward.7
$region0: #{gcn_forward.7}
  #allocation0 [shape = 'u32[]', space=smem, size = 0x4, offset = 0x4, fixed_abs, tag = 'smem constant byte address 0x4 - core index']
  #allocation1 [shape = 'u32[144,128]{1,0:T(1,128)}', space=vmem, size = 0x12000, scoped, tag = 'internal scratch']
  #allocation2 [shape = 'f32[128,128]{1,0:T(8,128)}', space=vmem, size = 0x10000, scoped, tag = 'scratch operand']
  %s0 = inlined_call_operand.vmem [shape: bf16[128,16], index: 0, kind: input, shape index: {}]
  %s1 = inlined_call_operand.vmem [shape: bf16[16,128], index: 1, kind: input, shape index: {}]
  %s2 = inlined_call_operand.vmem [shape: bf16[128,128], index: 2, kind: output, shape index: {}]
  %s3 = sld [smem:[#allocation0]]
  $region26: #{gcn_forward.7} parent=0
    _
  %s5 = ssub.s32 1, %s3
  %s6 = scalar_select 0, %s5, %s3
  // Predicated region
  $region2: #{gcn_forward.7} parent=0 // pred_check
    _
  $region3: #{gcn_forward.7} parent=0 // pred_check_branch
    %8 = sbr.rel (0) target = $region5
  $region4: #{gcn_forward.7} parent=0 // pred_region
    _
  $region5: #{gcn_forward.7} parent=0 // pred_fallthru
    _
  // Predicated region
  $region6: #{gcn_forward.7} parent=0 // pred_check
    _
  $region7: #{gcn_forward.7} parent=0 // pred_check_branch
    %10 = sbr.rel (0) target = $region9
  $region8: #{gcn_forward.7} parent=0 // pred_region
    _
  $region9: #{gcn_forward.7} parent=0 // pred_fallthru
    _
  %p12 = scmp.eq.s32.totalorder 0, 0
  // Predicated region
  $region10: #{gcn_forward.7} parent=0 // pred_check
    %p13 = pneg %p12
  $region11: #{gcn_forward.7} parent=0 // pred_check_branch
    %15 = sbr.rel (%p13) target = $region13
  $region12: #{gcn_forward.7} parent=0 // pred_region
    %16 = vst [vmem:[#allocation2] sm:$0xff] 0.0
    %17 = vst [vmem:[#allocation2 + $0x8] sm:$0xff] 0.0
    %18 = vst [vmem:[#allocation2 + $0x10] sm:$0xff] 0.0
    %19 = vst [vmem:[#allocation2 + $0x18] sm:$0xff] 0.0
    %20 = vst [vmem:[#allocation2 + $0x20] sm:$0xff] 0.0
    %21 = vst [vmem:[#allocation2 + $0x28] sm:$0xff] 0.0
    %22 = vst [vmem:[#allocation2 + $0x30] sm:$0xff] 0.0
    %23 = vst [vmem:[#allocation2 + $0x38] sm:$0xff] 0.0
    %24 = vst [vmem:[#allocation2 + $0x40] sm:$0xff] 0.0
    %25 = vst [vmem:[#allocation2 + $0x48] sm:$0xff] 0.0
    %26 = vst [vmem:[#allocation2 + $0x50] sm:$0xff] 0.0
    %27 = vst [vmem:[#allocation2 + $0x58] sm:$0xff] 0.0
    %28 = vst [vmem:[#allocation2 + $0x60] sm:$0xff] 0.0
    %29 = vst [vmem:[#allocation2 + $0x68] sm:$0xff] 0.0
    %30 = vst [vmem:[#allocation2 + $0x70] sm:$0xff] 0.0
    %31 = vst [vmem:[#allocation2 + $0x78] sm:$0xff] 0.0
  $region13: #{gcn_forward.7} parent=0 // pred_fallthru
    _
  %v32 = vld [vmem:[#allocation2] sm:$0xff]
  %v33 = vld [vmem:[#allocation2 + $0x8] sm:$0xff]
  %v34 = vld [vmem:[#allocation2 + $0x10] sm:$0xff]
  %v35 = vld [vmem:[#allocation2 + $0x18] sm:$0xff]
  %v36 = vld [vmem:[#allocation2 + $0x20] sm:$0xff]
  %v37 = vld [vmem:[#allocation2 + $0x28] sm:$0xff]
  %v38 = vld [vmem:[#allocation2 + $0x30] sm:$0xff]
  %v39 = vld [vmem:[#allocation2 + $0x38] sm:$0xff]
  %v40 = vld [vmem:[#allocation2 + $0x40] sm:$0xff]
  %v41 = vld [vmem:[#allocation2 + $0x48] sm:$0xff]
  %v42 = vld [vmem:[#allocation2 + $0x50] sm:$0xff]
  %v43 = vld [vmem:[#allocation2 + $0x58] sm:$0xff]
  %v44 = vld [vmem:[#allocation2 + $0x60] sm:$0xff]
  %v45 = vld [vmem:[#allocation2 + $0x68] sm:$0xff]
  %v46 = vld [vmem:[#allocation2 + $0x70] sm:$0xff]
  %v47 = vld [vmem:[#allocation2 + $0x78] sm:$0xff]
  %v48 = vld [vmem:[%s0] sm:$0xf]
  %v49 = vld [vmem:[%s0 + $0x4] sm:$0xf]
  %v50 = vld [vmem:[%s0 + $0x8] sm:$0xf]
  %v51 = vld [vmem:[%s0 + $0xc] sm:$0xf]
  %v52 = vld [vmem:[%s0 + $0x10] sm:$0xf]
  %v53 = vld [vmem:[%s0 + $0x14] sm:$0xf]
  %v54 = vld [vmem:[%s0 + $0x18] sm:$0xf]
  %v55 = vld [vmem:[%s0 + $0x1c] sm:$0xf]
  %v56 = vld [vmem:[%s0 + $0x20] sm:$0xf]
  %v57 = vld [vmem:[%s0 + $0x24] sm:$0xf]
  %v58 = vld [vmem:[%s0 + $0x28] sm:$0xf]
  %v59 = vld [vmem:[%s0 + $0x2c] sm:$0xf]
  %v60 = vld [vmem:[%s0 + $0x30] sm:$0xf]
  %v61 = vld [vmem:[%s0 + $0x34] sm:$0xf]
  %v62 = vld [vmem:[%s0 + $0x38] sm:$0xf]
  %v63 = vld [vmem:[%s0 + $0x3c] sm:$0xf]
  %v64 = vld [vmem:[%s1] sm:$0xf]
  %v65 = vld [vmem:[%s1 + $0x4] sm:$0xf]
  %v82 = vunpack.c.l.b16 %v48
  %v83 = vunpack.c.l.b16 %v49
  %v84 = vunpack.c.l.b16 %v50
  %v85 = vunpack.c.l.b16 %v51
  %v86 = vunpack.c.l.b16 %v52
  %v87 = vunpack.c.l.b16 %v53
  %v88 = vunpack.c.l.b16 %v54
  %v89 = vunpack.c.l.b16 %v55
  %v90 = vunpack.c.l.b16 %v56
  %v91 = vunpack.c.l.b16 %v57
  %v92 = vunpack.c.l.b16 %v58
  %v93 = vunpack.c.l.b16 %v59
  %v94 = vunpack.c.l.b16 %v60
  %v95 = vunpack.c.l.b16 %v61
  %v96 = vunpack.c.l.b16 %v62
  %v97 = vunpack.c.l.b16 %v63
  %v98 = vpack.c.b16 %v83, %v82
  %v99 = vpack.c.b16 %v85, %v84
  %v100 = vpack.c.b16 %v87, %v86
  %v101 = vpack.c.b16 %v89, %v88
  %v102 = vpack.c.b16 %v91, %v90
  %v103 = vpack.c.b16 %v93, %v92
  %v104 = vpack.c.b16 %v95, %v94
  %v105 = vpack.c.b16 %v97, %v96
  %v108 = vunpack.c.l.b16 %v64
  %v109 = vunpack.c.l.b16 %v65
  %v110 = vpack.c.b16 %v109, %v108
  %vm112 = vcmask 130048
  %v114 = vsel %vm112, %v98, 0
  %v117 = vsel %vm112, %v99, 0
  %v120 = vsel %vm112, %v100, 0
  %v123 = vsel %vm112, %v101, 0
  %v126 = vsel %vm112, %v102, 0
  %v129 = vsel %vm112, %v103, 0
  %v132 = vsel %vm112, %v104, 0
  %v135 = vsel %vm112, %v105, 0
  %137 = vmatprep.subr.bf16.mxu0 0
  %138 = vmatpush1.bf16.msra.mxu0 %v110
  %139 = vmatprep.subr.bf16.mxu0 0
  %140 = vmatpush1.bf16.msra.mxu0 0
  %141 = vmatprep.subr.bf16.mxu0 0
  %142 = vmatpush1.bf16.msra.mxu0 0
  %143 = vmatprep.subr.bf16.mxu0 0
  %144 = vmatpush1.bf16.msra.mxu0 0
  %145 = vmatprep.subr.bf16.mxu0 0
  %146 = vmatpush1.bf16.msra.mxu0 0
  %147 = vmatprep.subr.bf16.mxu0 0
  %148 = vmatpush1.bf16.msra.mxu0 0
  %149 = vmatprep.subr.bf16.mxu0 0
  %150 = vmatpush1.bf16.msra.mxu0 0
  %151 = vmatprep.subr.bf16.mxu0 0
  %152 = vmatpush1.bf16.msra.mxu0 0
  %153 = vmatprep.subr.bf16.mxu0 0
  %154 = vmatpush1.bf16.msra.mxu0 0
  %155 = vmatprep.subr.bf16.mxu0 0
  %156 = vmatpush1.bf16.msra.mxu0 0
  %157 = vmatprep.subr.bf16.mxu0 0
  %158 = vmatpush1.bf16.msra.mxu0 0
  %159 = vmatprep.subr.bf16.mxu0 0
  %160 = vmatpush1.bf16.msra.mxu0 0
  %161 = vmatprep.subr.bf16.mxu0 0
  %162 = vmatpush1.bf16.msra.mxu0 0
  %163 = vmatprep.subr.bf16.mxu0 0
  %164 = vmatpush1.bf16.msra.mxu0 0
  %165 = vmatprep.subr.bf16.mxu0 0
  %166 = vmatpush1.bf16.msra.mxu0 0
  %167 = vmatprep.subr.bf16.mxu0 0
  %168 = vmatpush1.bf16.msra.mxu0 0
  %169 = vmatprep.mubr.bf16.mxu0 0
  %170 = vmatmul.mubr.bf16.gmra.mrb[0].mxu0 %v114
  %v171 = vpop.f32.mrb[0].mxu0
  %v172 = vadd.f32 0.0, %v171
  %v173 = vpop.f32.mrb[0].mxu0
  %v174 = vpop.f32.mrb[0].mxu0
  %v175 = vadd.f32 0.0, %v174
  %v176 = vpop.f32.mrb[0].mxu0
  %177 = vmatprep.mubr.bf16.mxu0 0
  %178 = vmatmul.mubr.bf16.gmra.mrb[0].mxu0 %v117
  %v179 = vpop.f32.mrb[0].mxu0
  %v180 = vadd.f32 0.0, %v179
  %v181 = vpop.f32.mrb[0].mxu0
  %v182 = vpop.f32.mrb[0].mxu0
  %v183 = vadd.f32 0.0, %v182
  %v184 = vpop.f32.mrb[0].mxu0
  %185 = vmatprep.mubr.bf16.mxu0 0
  %186 = vmatmul.mubr.bf16.gmra.mrb[0].mxu0 %v120
  %v187 = vpop.f32.mrb[0].mxu0
  %v188 = vadd.f32 0.0, %v187
  %v189 = vpop.f32.mrb[0].mxu0
  %v190 = vpop.f32.mrb[0].mxu0
  %v191 = vadd.f32 0.0, %v190
  %v192 = vpop.f32.mrb[0].mxu0
  %193 = vmatprep.mubr.bf16.mxu0 0
  %194 = vmatmul.mubr.bf16.gmra.mrb[0].mxu0 %v123
  %v195 = vpop.f32.mrb[0].mxu0
  %v196 = vadd.f32 0.0, %v195
  %v197 = vpop.f32.mrb[0].mxu0
  %v198 = vpop.f32.mrb[0].mxu0
  %v199 = vadd.f32 0.0, %v198
  %v200 = vpop.f32.mrb[0].mxu0
  %201 = vmatprep.mubr.bf16.mxu0 0
  %202 = vmatmul.mubr.bf16.gmra.mrb[0].mxu0 %v126
  %v203 = vpop.f32.mrb[0].mxu0
  %v204 = vadd.f32 0.0, %v203
  %v205 = vpop.f32.mrb[0].mxu0
  %v206 = vpop.f32.mrb[0].mxu0
  %v207 = vadd.f32 0.0, %v206
  %v208 = vpop.f32.mrb[0].mxu0
  %209 = vmatprep.mubr.bf16.mxu0 0
  %210 = vmatmul.mubr.bf16.gmra.mrb[0].mxu0 %v129
  %v211 = vpop.f32.mrb[0].mxu0
  %v212 = vadd.f32 0.0, %v211
  %v213 = vpop.f32.mrb[0].mxu0
  %v214 = vpop.f32.mrb[0].mxu0
  %v215 = vadd.f32 0.0, %v214
  %v216 = vpop.f32.mrb[0].mxu0
  %217 = vmatprep.mubr.bf16.mxu0 0
  %218 = vmatmul.mubr.bf16.gmra.mrb[0].mxu0 %v132
  %v219 = vpop.f32.mrb[0].mxu0
  %v220 = vadd.f32 0.0, %v219
  %v221 = vpop.f32.mrb[0].mxu0
  %v222 = vpop.f32.mrb[0].mxu0
  %v223 = vadd.f32 0.0, %v222
  %v224 = vpop.f32.mrb[0].mxu0
  %225 = vmatprep.mubr.bf16.mxu0 0
  %226 = vmatmul.mubr.bf16.gmra.mrb[0].mxu0 %v135
  %v227 = vpop.f32.mrb[0].mxu0
  %v228 = vadd.f32 0.0, %v227
  %v229 = vpop.f32.mrb[0].mxu0
  %v230 = vpop.f32.mrb[0].mxu0
  %v231 = vadd.f32 0.0, %v230
  %v232 = vpop.f32.mrb[0].mxu0
  %233 = vdwg.mxu0
  %v234 = vadd.f32 %v32, %v172
  %v235 = vadd.f32 %v33, %v175
  %v236 = vadd.f32 %v34, %v180
  %v237 = vadd.f32 %v35, %v183
  %v238 = vadd.f32 %v36, %v188
  %v239 = vadd.f32 %v37, %v191
  %v240 = vadd.f32 %v38, %v196
  %v241 = vadd.f32 %v39, %v199
  %v242 = vadd.f32 %v40, %v204
  %v243 = vadd.f32 %v41, %v207
  %v244 = vadd.f32 %v42, %v212
  %v245 = vadd.f32 %v43, %v215
  %v246 = vadd.f32 %v44, %v220
  %v247 = vadd.f32 %v45, %v223
  %v248 = vadd.f32 %v46, %v228
  %v249 = vadd.f32 %v47, %v231
  %250 = vst [vmem:[#allocation2] sm:$0xff] %v234
  %251 = vst [vmem:[#allocation2 + $0x8] sm:$0xff] %v235
  %252 = vst [vmem:[#allocation2 + $0x10] sm:$0xff] %v236
  %253 = vst [vmem:[#allocation2 + $0x18] sm:$0xff] %v237
  %254 = vst [vmem:[#allocation2 + $0x20] sm:$0xff] %v238
  %255 = vst [vmem:[#allocation2 + $0x28] sm:$0xff] %v239
  %256 = vst [vmem:[#allocation2 + $0x30] sm:$0xff] %v240
  %257 = vst [vmem:[#allocation2 + $0x38] sm:$0xff] %v241
  %258 = vst [vmem:[#allocation2 + $0x40] sm:$0xff] %v242
  %259 = vst [vmem:[#allocation2 + $0x48] sm:$0xff] %v243
  %260 = vst [vmem:[#allocation2 + $0x50] sm:$0xff] %v244
  %261 = vst [vmem:[#allocation2 + $0x58] sm:$0xff] %v245
  %262 = vst [vmem:[#allocation2 + $0x60] sm:$0xff] %v246
  %263 = vst [vmem:[#allocation2 + $0x68] sm:$0xff] %v247
  %264 = vst [vmem:[#allocation2 + $0x70] sm:$0xff] %v248
  %265 = vst [vmem:[#allocation2 + $0x78] sm:$0xff] %v249
  // Predicated region
  $region14: #{gcn_forward.7} parent=0 // pred_check
    %p266 = pneg %p12
  $region15: #{gcn_forward.7} parent=0 // pred_check_branch
    %268 = sbr.rel (%p266) target = $region17
  $region16: #{gcn_forward.7} parent=0 // pred_region
    %v269 = vld [vmem:[#allocation2] sm:$0xff]
    %v270 = vld [vmem:[#allocation2 + $0x8] sm:$0xff]
    %v271 = vld [vmem:[#allocation2 + $0x10] sm:$0xff]
    %v272 = vld [vmem:[#allocation2 + $0x18] sm:$0xff]
    %v273 = vld [vmem:[#allocation2 + $0x20] sm:$0xff]
    %v274 = vld [vmem:[#allocation2 + $0x28] sm:$0xff]
    %v275 = vld [vmem:[#allocation2 + $0x30] sm:$0xff]
    %v276 = vld [vmem:[#allocation2 + $0x38] sm:$0xff]
    %v277 = vld [vmem:[#allocation2 + $0x40] sm:$0xff]
    %v278 = vld [vmem:[#allocation2 + $0x48] sm:$0xff]
    %v279 = vld [vmem:[#allocation2 + $0x50] sm:$0xff]
    %v280 = vld [vmem:[#allocation2 + $0x58] sm:$0xff]
    %v281 = vld [vmem:[#allocation2 + $0x60] sm:$0xff]
    %v282 = vld [vmem:[#allocation2 + $0x68] sm:$0xff]
    %v283 = vld [vmem:[#allocation2 + $0x70] sm:$0xff]
    %v284 = vld [vmem:[#allocation2 + $0x78] sm:$0xff]
    %v285 = vpack.c.bf16 %v270, %v269
    %v286 = vpack.c.bf16 %v272, %v271
    %v287 = vpack.c.bf16 %v274, %v273
    %v288 = vpack.c.bf16 %v276, %v275
    %v289 = vpack.c.bf16 %v278, %v277
    %v290 = vpack.c.bf16 %v280, %v279
    %v291 = vpack.c.bf16 %v282, %v281
    %v292 = vpack.c.bf16 %v284, %v283
    %v301 = vunpack.c.l.b16 %v285
    %v302 = vunpack.c.h.b16 %v285
    %v303 = vunpack.c.l.b16 %v286
    %v304 = vunpack.c.h.b16 %v286
    %v305 = vunpack.c.l.b16 %v287
    %v306 = vunpack.c.h.b16 %v287
    %v307 = vunpack.c.l.b16 %v288
    %v308 = vunpack.c.h.b16 %v288
    %v309 = vunpack.c.l.b16 %v289
    %v310 = vunpack.c.h.b16 %v289
    %v311 = vunpack.c.l.b16 %v290
    %v312 = vunpack.c.h.b16 %v290
    %v313 = vunpack.c.l.b16 %v291
    %v314 = vunpack.c.h.b16 %v291
    %v315 = vunpack.c.l.b16 %v292
    %v316 = vunpack.c.h.b16 %v292
    %v317 = vpack.c.b16 %v301, %v301
    %v318 = vpack.c.b16 %v302, %v302
    %v319 = vpack.c.b16 %v303, %v303
    %v320 = vpack.c.b16 %v304, %v304
    %v321 = vpack.c.b16 %v305, %v305
    %v322 = vpack.c.b16 %v306, %v306
    %v323 = vpack.c.b16 %v307, %v307
    %v324 = vpack.c.b16 %v308, %v308
    %v325 = vpack.c.b16 %v309, %v309
    %v326 = vpack.c.b16 %v310, %v310
    %v327 = vpack.c.b16 %v311, %v311
    %v328 = vpack.c.b16 %v312, %v312
    %v329 = vpack.c.b16 %v313, %v313
    %v330 = vpack.c.b16 %v314, %v314
    %v331 = vpack.c.b16 %v315, %v315
    %v332 = vpack.c.b16 %v316, %v316
    %349 = vst [vmem:[%s2] sm:$0xf] %v317
    %350 = vst [vmem:[%s2 + $0x4] sm:$0xf] %v318
    %351 = vst [vmem:[%s2 + $0x8] sm:$0xf] %v319
    %352 = vst [vmem:[%s2 + $0xc] sm:$0xf] %v320
    %353 = vst [vmem:[%s2 + $0x10] sm:$0xf] %v321
    %354 = vst [vmem:[%s2 + $0x14] sm:$0xf] %v322
    %355 = vst [vmem:[%s2 + $0x18] sm:$0xf] %v323
    %356 = vst [vmem:[%s2 + $0x1c] sm:$0xf] %v324
    %357 = vst [vmem:[%s2 + $0x20] sm:$0xf] %v325
    %358 = vst [vmem:[%s2 + $0x24] sm:$0xf] %v326
    %359 = vst [vmem:[%s2 + $0x28] sm:$0xf] %v327
    %360 = vst [vmem:[%s2 + $0x2c] sm:$0xf] %v328
    %361 = vst [vmem:[%s2 + $0x30] sm:$0xf] %v329
    %362 = vst [vmem:[%s2 + $0x34] sm:$0xf] %v330
    %363 = vst [vmem:[%s2 + $0x38] sm:$0xf] %v331
    %364 = vst [vmem:[%s2 + $0x3c] sm:$0xf] %v332
  $region17: #{gcn_forward.7} parent=0 // pred_fallthru
    _
  // Predicated region
  $region18: #{gcn_forward.7} parent=0 // pred_check
    _
  $region19: #{gcn_forward.7} parent=0 // pred_check_branch
    %366 = sbr.rel (0) target = $region21
  $region20: #{gcn_forward.7} parent=0 // pred_region
    _
  $region21: #{gcn_forward.7} parent=0 // pred_fallthru
    _
  // Predicated region
  $region22: #{gcn_forward.7} parent=0 // pred_check
    _
  $region23: #{gcn_forward.7} parent=0 // pred_check_branch
    %368 = sbr.rel (0) target = $region25
  $region24: #{gcn_forward.7} parent=0 // pred_region
    _
  $region25: #{gcn_forward.7} parent=0 // pred_fallthru
    _

// kernel: gcn_forward.13
$region0: #{gcn_forward.13}
  #allocation0 [shape = 'u32[]', space=smem, size = 0x4, offset = 0x4, fixed_abs, tag = 'smem constant byte address 0x4 - core index']
  #allocation1 [shape = 'u32[144,128]{1,0:T(1,128)}', space=vmem, size = 0x12000, scoped, tag = 'internal scratch']
  #allocation2 [shape = 'f32[8,128]{1,0:T(8,128)}', space=vmem, size = 0x1000, scoped, tag = 'scratch operand']
  %s0 = inlined_call_operand.vmem [shape: bf16[8,128], index: 0, kind: input, shape index: {}]
  %s1 = inlined_call_operand.vmem [shape: bf16[128,128], index: 1, kind: input, shape index: {}]
  %s2 = inlined_call_operand.vmem [shape: bf16[128,128], index: 2, kind: input, shape index: {}]
  %s3 = inlined_call_operand.vmem [shape: f32[1,128], index: 3, kind: input, shape index: {}]
  %s4 = inlined_call_operand.hbm [shape: f32[8,128], index: 4, kind: output, shape index: {}]
  %s5 = sld [smem:[#allocation0]]
  $region34: #{gcn_forward.13} parent=0
    _
  %s7 = ssub.s32 1, %s5
  %s8 = scalar_select 0, %s7, %s5
  $region1: #{gcn_forward.13} parent=0
    #allocation3 [shape = 'u8[4096]{0}', space=vmem, size = 0x1000, scoped, tag = 'output window, operand 0, single buffered']
    #allocation4 [shape = 's32[1]{0}', space=sflag, size = 0x4, scoped, tag = 'scoped memory for gcn_forward.13']
    %9 = vsyncpa [#allocation4], 0
    // Predicated region
    $region2: #{gcn_forward.13} parent=1 // pred_check
      _
    $region3: #{gcn_forward.13} parent=1 // pred_check_branch
      %11 = sbr.rel (0) target = $region5
    $region4: #{gcn_forward.13} parent=1 // pred_region
      _
    $region5: #{gcn_forward.13} parent=1 // pred_fallthru
      _
    // Predicated region
    $region6: #{gcn_forward.13} parent=1 // pred_check
      _
    $region7: #{gcn_forward.13} parent=1 // pred_check_branch
      %13 = sbr.rel (0) target = $region9
    $region8: #{gcn_forward.13} parent=1 // pred_region
      _
    $region9: #{gcn_forward.13} parent=1 // pred_fallthru
      _
    // Predicated region
    $region10: #{gcn_forward.13} parent=1 // pred_check
      _
    $region11: #{gcn_forward.13} parent=1 // pred_check_branch
      %15 = sbr.rel (0) target = $region13
    $region12: #{gcn_forward.13} parent=1 // pred_region
      _
    $region13: #{gcn_forward.13} parent=1 // pred_fallthru
      _
    // Predicated region
    $region14: #{gcn_forward.13} parent=1 // pred_check
      _
    $region15: #{gcn_forward.13} parent=1 // pred_check_branch
      %17 = sbr.rel (0) target = $region17
    $region16: #{gcn_forward.13} parent=1 // pred_region
      _
    $region17: #{gcn_forward.13} parent=1 // pred_fallthru
      _
    %p19 = scmp.eq.s32.totalorder 0, 0
    // Predicated region
    $region18: #{gcn_forward.13} parent=1 // pred_check
      %p20 = pneg %p19
    $region19: #{gcn_forward.13} parent=1 // pred_check_branch
      %22 = sbr.rel (%p20) target = $region21
    $region20: #{gcn_forward.13} parent=1 // pred_region
      %23 = vst [vmem:[#allocation2] sm:$0xff] 0.0
    $region21: #{gcn_forward.13} parent=1 // pred_fallthru
      _
    %v24 = vld [vmem:[#allocation2] sm:$0xff]
    %v25 = vld [vmem:[%s0] sm:$0xf]
    %v26 = vld [vmem:[%s1] sm:$0xf]
    %v27 = vld [vmem:[%s1 + $0x4] sm:$0xf]
    %v28 = vld [vmem:[%s1 + $0x8] sm:$0xf]
    %v29 = vld [vmem:[%s1 + $0xc] sm:$0xf]
    %v30 = vld [vmem:[%s1 + $0x10] sm:$0xf]
    %v31 = vld [vmem:[%s1 + $0x14] sm:$0xf]
    %v32 = vld [vmem:[%s1 + $0x18] sm:$0xf]
    %v33 = vld [vmem:[%s1 + $0x1c] sm:$0xf]
    %v34 = vld [vmem:[%s1 + $0x20] sm:$0xf]
    %v35 = vld [vmem:[%s1 + $0x24] sm:$0xf]
    %v36 = vld [vmem:[%s1 + $0x28] sm:$0xf]
    %v37 = vld [vmem:[%s1 + $0x2c] sm:$0xf]
    %v38 = vld [vmem:[%s1 + $0x30] sm:$0xf]
    %v39 = vld [vmem:[%s1 + $0x34] sm:$0xf]
    %v40 = vld [vmem:[%s1 + $0x38] sm:$0xf]
    %v41 = vld [vmem:[%s1 + $0x3c] sm:$0xf]
    %v58 = vunpack.c.l.b16 %v26
    %v59 = vunpack.c.l.b16 %v27
    %v60 = vunpack.c.l.b16 %v28
    %v61 = vunpack.c.l.b16 %v29
    %v62 = vunpack.c.l.b16 %v30
    %v63 = vunpack.c.l.b16 %v31
    %v64 = vunpack.c.l.b16 %v32
    %v65 = vunpack.c.l.b16 %v33
    %v66 = vunpack.c.l.b16 %v34
    %v67 = vunpack.c.l.b16 %v35
    %v68 = vunpack.c.l.b16 %v36
    %v69 = vunpack.c.l.b16 %v37
    %v70 = vunpack.c.l.b16 %v38
    %v71 = vunpack.c.l.b16 %v39
    %v72 = vunpack.c.l.b16 %v40
    %v73 = vunpack.c.l.b16 %v41
    %v74 = vpack.c.b16 %v59, %v58
    %v75 = vpack.c.b16 %v61, %v60
    %v76 = vpack.c.b16 %v63, %v62
    %v77 = vpack.c.b16 %v65, %v64
    %v78 = vpack.c.b16 %v67, %v66
    %v79 = vpack.c.b16 %v69, %v68
    %v80 = vpack.c.b16 %v71, %v70
    %v81 = vpack.c.b16 %v73, %v72
    %90 = vmatprep.subr.bf16.mxu0 0
    %91 = vmatpush1.bf16.msra.mxu0 %v74
    %92 = vmatprep.subr.bf16.mxu0 0
    %93 = vmatpush1.bf16.msra.mxu0 %v75
    %94 = vmatprep.subr.bf16.mxu0 0
    %95 = vmatpush1.bf16.msra.mxu0 %v76
    %96 = vmatprep.subr.bf16.mxu0 0
    %97 = vmatpush1.bf16.msra.mxu0 %v77
    %98 = vmatprep.subr.bf16.mxu0 0
    %99 = vmatpush1.bf16.msra.mxu0 %v78
    %100 = vmatprep.subr.bf16.mxu0 0
    %101 = vmatpush1.bf16.msra.mxu0 %v79
    %102 = vmatprep.subr.bf16.mxu0 0
    %103 = vmatpush1.bf16.msra.mxu0 %v80
    %104 = vmatprep.subr.bf16.mxu0 0
    %105 = vmatpush1.bf16.msra.mxu0 %v81
    %106 = vmatprep.subr.bf16.mxu0 0
    %107 = vmatpush1.bf16.msra.mxu0 0
    %108 = vmatprep.subr.bf16.mxu0 0
    %109 = vmatpush1.bf16.msra.mxu0 0
    %110 = vmatprep.subr.bf16.mxu0 0
    %111 = vmatpush1.bf16.msra.mxu0 0
    %112 = vmatprep.subr.bf16.mxu0 0
    %113 = vmatpush1.bf16.msra.mxu0 0
    %114 = vmatprep.subr.bf16.mxu0 0
    %115 = vmatpush1.bf16.msra.mxu0 0
    %116 = vmatprep.subr.bf16.mxu0 0
    %117 = vmatpush1.bf16.msra.mxu0 0
    %118 = vmatprep.subr.bf16.mxu0 0
    %119 = vmatpush1.bf16.msra.mxu0 0
    %120 = vmatprep.subr.bf16.mxu0 0
    %121 = vmatpush1.bf16.msra.mxu0 0
    %122 = vmatprep.mubr.bf16.mxu0 0
    %123 = vmatmul.mubr.bf16.gmra.mrb[0].mxu0 %v25
    %v124 = vpop.f32.mrb[0].mxu0
    %v125 = vadd.f32 0.0, %v124
    %v126 = vpop.f32.mrb[0].mxu0
    %v127 = vpop.f32.mrb[0].mxu0
    %v128 = vpop.f32.mrb[0].mxu0
    %129 = vdwg.mxu0
    %v130 = vadd.f32 %v24, %v125
    %131 = vst [vmem:[#allocation2] sm:$0xff] %v130
    // Predicated region
    $region22: #{gcn_forward.13} parent=1 // pred_check
      %p132 = pneg %p19
    $region23: #{gcn_forward.13} parent=1 // pred_check_branch
      %134 = sbr.rel (%p132) target = $region25
    $region24: #{gcn_forward.13} parent=1 // pred_region
      %v135 = vld [vmem:[#allocation2] sm:$0xff]
      %v136 = vpack.c.bf16 %v135, %v135
      %v137 = vld [vmem:[%s2] sm:$0xf]
      %v138 = vld [vmem:[%s2 + $0x4] sm:$0xf]
      %v139 = vld [vmem:[%s2 + $0x8] sm:$0xf]
      %v140 = vld [vmem:[%s2 + $0xc] sm:$0xf]
      %v141 = vld [vmem:[%s2 + $0x10] sm:$0xf]
      %v142 = vld [vmem:[%s2 + $0x14] sm:$0xf]
      %v143 = vld [vmem:[%s2 + $0x18] sm:$0xf]
      %v144 = vld [vmem:[%s2 + $0x1c] sm:$0xf]
      %v145 = vld [vmem:[%s2 + $0x20] sm:$0xf]
      %v146 = vld [vmem:[%s2 + $0x24] sm:$0xf]
      %v147 = vld [vmem:[%s2 + $0x28] sm:$0xf]
      %v148 = vld [vmem:[%s2 + $0x2c] sm:$0xf]
      %v149 = vld [vmem:[%s2 + $0x30] sm:$0xf]
      %v150 = vld [vmem:[%s2 + $0x34] sm:$0xf]
      %v151 = vld [vmem:[%s2 + $0x38] sm:$0xf]
      %v152 = vld [vmem:[%s2 + $0x3c] sm:$0xf]
      %v153 = vld [vmem:[%s3] sm:$0x1]
      %v155 = vlaneseq
      %v156 = vshrl.u32 %v155, 7
      %v157 = vsub.s32 0, %v156
      %v158 = vrot.slane %v153, %v157
      %v176 = vunpack.c.l.b16 %v137
      %v177 = vunpack.c.l.b16 %v138
      %v178 = vunpack.c.l.b16 %v139
      %v179 = vunpack.c.l.b16 %v140
      %v180 = vunpack.c.l.b16 %v141
      %v181 = vunpack.c.l.b16 %v142
      %v182 = vunpack.c.l.b16 %v143
      %v183 = vunpack.c.l.b16 %v144
      %v184 = vunpack.c.l.b16 %v145
      %v185 = vunpack.c.l.b16 %v146
      %v186 = vunpack.c.l.b16 %v147
      %v187 = vunpack.c.l.b16 %v148
      %v188 = vunpack.c.l.b16 %v149
      %v189 = vunpack.c.l.b16 %v150
      %v190 = vunpack.c.l.b16 %v151
      %v191 = vunpack.c.l.b16 %v152
      %v192 = vpack.c.b16 %v177, %v176
      %v193 = vpack.c.b16 %v179, %v178
      %v194 = vpack.c.b16 %v181, %v180
      %v195 = vpack.c.b16 %v183, %v182
      %v196 = vpack.c.b16 %v185, %v184
      %v197 = vpack.c.b16 %v187, %v186
      %v198 = vpack.c.b16 %v189, %v188
      %v199 = vpack.c.b16 %v191, %v190
      %208 = vmatprep.subr.bf16.mxu0 0
      %209 = vmatpush1.bf16.msra.mxu0 %v192
      %210 = vmatprep.subr.bf16.mxu0 0
      %211 = vmatpush1.bf16.msra.mxu0 %v193
      %212 = vmatprep.subr.bf16.mxu0 0
      %213 = vmatpush1.bf16.msra.mxu0 %v194
      %214 = vmatprep.subr.bf16.mxu0 0
      %215 = vmatpush1.bf16.msra.mxu0 %v195
      %216 = vmatprep.subr.bf16.mxu0 0
      %217 = vmatpush1.bf16.msra.mxu0 %v196
      %218 = vmatprep.subr.bf16.mxu0 0
      %219 = vmatpush1.bf16.msra.mxu0 %v197
      %220 = vmatprep.subr.bf16.mxu0 0
      %221 = vmatpush1.bf16.msra.mxu0 %v198
      %222 = vmatprep.subr.bf16.mxu0 0
      %223 = vmatpush1.bf16.msra.mxu0 %v199
      %224 = vmatprep.subr.bf16.mxu0 0
      %225 = vmatpush1.bf16.msra.mxu0 0
      %226 = vmatprep.subr.bf16.mxu0 0
      %227 = vmatpush1.bf16.msra.mxu0 0
      %228 = vmatprep.subr.bf16.mxu0 0
      %229 = vmatpush1.bf16.msra.mxu0 0
      %230 = vmatprep.subr.bf16.mxu0 0
      %231 = vmatpush1.bf16.msra.mxu0 0
      %232 = vmatprep.subr.bf16.mxu0 0
      %233 = vmatpush1.bf16.msra.mxu0 0
      %234 = vmatprep.subr.bf16.mxu0 0
      %235 = vmatpush1.bf16.msra.mxu0 0
      %236 = vmatprep.subr.bf16.mxu0 0
      %237 = vmatpush1.bf16.msra.mxu0 0
      %238 = vmatprep.subr.bf16.mxu0 0
      %239 = vmatpush1.bf16.msra.mxu0 0
      %240 = vmatprep.mubr.bf16.mxu0 0
      %241 = vmatmul.mubr.bf16.gmra.mrb[0].mxu0 %v136
      %v242 = vpop.f32.mrb[0].mxu0
      %v243 = vadd.f32 %v158, %v242
      %v244 = vpop.f32.mrb[0].mxu0
      %v245 = vpop.f32.mrb[0].mxu0
      %v246 = vpop.f32.mrb[0].mxu0
      %247 = vdwg.mxu0
      %248 = vst [vmem:[#allocation3] sm:$0xff] %v243
    $region25: #{gcn_forward.13} parent=1 // pred_fallthru
      _
    // Predicated region
    $region26: #{gcn_forward.13} parent=1 // pred_check
      _
    $region27: #{gcn_forward.13} parent=1 // pred_check_branch
      %250 = sbr.rel (0) target = $region29
    $region28: #{gcn_forward.13} parent=1 // pred_region
      %s252 = ssub.s32 128, 128
      %253 = vsyncadd [#allocation4], %s252
      %s255 = sshll.u32 [#allocation3], 4
      %s256 = int_to_ptr.vmem [resolvable:$true] %s255
      %258 = dma.vmem_to_hbm [thread:$0]  %s256, 128, %s4, [#allocation4]
    $region29: #{gcn_forward.13} parent=1 // pred_fallthru
      _
    // Predicated region
    $region30: #{gcn_forward.13} parent=1 // pred_check
      _
    $region31: #{gcn_forward.13} parent=1 // pred_check_branch
      %260 = sbr.rel (0) target = $region33
    $region32: #{gcn_forward.13} parent=1 // pred_region
      %261 = dma.done [#allocation4], 128
    $region33: #{gcn_forward.13} parent=1 // pred_fallthru
      _
    %262 = vsyncpa [#allocation4], 1

</llo_original>
